<compile_context>
chip_gen: v6e
topology: v6e:2x2x1
jax: 0.10.0
libtpu: 0.0.40
codegen_flags: <defaults>
</compile_context>

<pallas_src>
import jax
import jax.numpy as jnp
from jax.experimental import pallas as pl
from jax.experimental.pallas import tpu as pltpu

# ----- hyperparameters (module globals in the PyTorch source) -----
d_model = 32
n_heads = 4
d_q = d_k = d_v = 8
SEQ = 8
BATCH = 2


def _mha_kernel(x_ref, mask_ref, w_ref, b_ref, out_ref, attn_ref):
    """Single invocation, everything resident in VMEM.

    x_ref    : [3, B*S, D]  f32   stacked (Q, K, V)
    mask_ref : [B*S, S]     f32   additive mask (0 or -1e9), rows ordered (b, q)
    w_ref    : [4, D, D]    bf16  (Wq.T*scale, Wk.T, Wv.T, Wo.T)   (D == H*d_head)
    b_ref    : [6, D]       f32   rows: bq*scale, bk, bv, bo, gamma, beta
    out_ref  : [B*S, D]     f32
    attn_ref : [B*S, H*S]   f32   attn[b*S+q, h*S+k]
    """
    BS, S = mask_ref.shape
    B = BS // S
    H = n_heads
    dh = d_q

    b_all = b_ref[...]                       # [6, D]
    xq = x_ref[0]                            # [BS, D]  (also the residual)
    xk = x_ref[1]
    xv = x_ref[2]

    # ---- head-fused projections: three bf16 MXU dots, f32 accumulation ----
    q_all = jnp.dot(xq.astype(jnp.bfloat16), w_ref[0],
                    preferred_element_type=jnp.float32) + b_all[0:1, :]
    k_all = jnp.dot(xk.astype(jnp.bfloat16), w_ref[1],
                    preferred_element_type=jnp.float32) + b_all[1:2, :]
    v_all = jnp.dot(xv.astype(jnp.bfloat16), w_ref[2],
                    preferred_element_type=jnp.float32) + b_all[2:3, :]

    q_bf = q_all.astype(jnp.bfloat16)        # cast once, slice per head below
    k_bf = k_all.astype(jnp.bfloat16)
    v_bf = v_all.astype(jnp.bfloat16)
    neg = mask_ref[...]                      # [BS, S] additive mask

    # ---- per-head score matmuls, ONE batched softmax over [H, BS, S] ----
    scores = jnp.stack(
        [jnp.einsum('bqd,bkd->bqk',
                    q_bf[:, h * dh:(h + 1) * dh].reshape(B, S, dh),
                    k_bf[:, h * dh:(h + 1) * dh].reshape(B, S, dh),
                    preferred_element_type=jnp.float32).reshape(BS, S)
         for h in range(H)], axis=0) + neg[None, :, :]           # [H, BS, S] f32

    m = jnp.max(scores, axis=-1, keepdims=True)
    e = jnp.exp(scores - m)
    denom = jnp.sum(e, axis=-1, keepdims=True)
    attn = e / denom                          # exact normalization (rows sum to 1)

    # ---- lane-dense attention store: one [BS, H*S] write ----
    attn_ref[...] = jnp.concatenate([attn[h] for h in range(H)], axis=-1)

    # ---- per-head context, assembled into [BS, H*d_v] slab ----
    attn_bf = attn.astype(jnp.bfloat16)
    ctx = jnp.concatenate(
        [jnp.einsum('bqk,bkd->bqd',
                    attn_bf[h].reshape(B, S, S),
                    v_bf[:, h * dh:(h + 1) * dh].reshape(B, S, dh),
                    preferred_element_type=jnp.float32).reshape(BS, dh)
         for h in range(H)], axis=-1)                            # [BS, H*d_v] f32

    # ---- fused output projection + residual + LayerNorm (f32 VPU/EUP math) ----
    x = jnp.dot(ctx.astype(jnp.bfloat16), w_ref[3],
                preferred_element_type=jnp.float32) + b_all[3:4, :] + xq
    mu = jnp.mean(x, axis=-1, keepdims=True)
    var = jnp.mean((x - mu) ** 2, axis=-1, keepdims=True)
    x_hat = (x - mu) * jax.lax.rsqrt(var + 1e-5)
    out_ref[...] = x_hat * b_all[4:5, :] + b_all[5:6, :]


def _full_spec(shape):
    """Full-array block at grid step 0."""
    return pl.BlockSpec(shape, lambda i, _nd=len(shape): (0,) * _nd)


def multi_head_attention(Q, K, V, attn_mask, params):
    """Q,K,V: [B,S,d_model] f32; attn_mask: [B,S,S] bool (True == masked).

    Returns (out [B,S,d_model], attn [B,n_heads,S,S])."""
    B, S, D = Q.shape
    BS = B * S
    wq, bq, wk, bk, wv, bv, wo, bo, gamma, beta = params
    scale = 1.0 / (float(d_k) ** 0.5)

    # ----- wrapper-side layout plumbing (free in XLA) -----
    # One bf16 weight slab [4, D, D]: Wq.T*scale, Wk.T, Wv.T, Wo.T
    w_all = jnp.stack([wq.T * scale, wk.T, wv.T, wo.T]).astype(jnp.bfloat16)
    # One f32 bias/scale slab [6, D]: bq*scale, bk, bv, bo, gamma, beta
    b_all = jnp.stack([bq * scale, bk, bv, bo, gamma, beta]).astype(jnp.float32)
    # One stacked activation slab [3, B*S, D]
    xqkv = jnp.stack([Q.reshape(BS, D), K.reshape(BS, D), V.reshape(BS, D)])
    # Additive mask, rows ordered (b, q)
    neg_mask = jnp.where(attn_mask, jnp.float32(-1e9),
                         jnp.float32(0.0)).reshape(BS, S)

    operands = (xqkv, neg_mask, w_all, b_all)
    in_specs = [_full_spec(x.shape) for x in operands]
    out_specs = [
        _full_spec((BS, D)),                  # out (lane-dense, d_model wide)
        _full_spec((BS, n_heads * S)),        # attn as [b*S+q, h*S+k] (lane-dense)
    ]

    # TODO(synk): if B/S/H are scaled up, switch to a (batch, q-tile) grid with a
    # leading "parallel" axis (uses v7x's 2nd TensorCore) and size tiles for 64 MiB VMEM.
    out2d, attn2d = pl.pallas_call(
        _mha_kernel,
        out_shape=[
            jax.ShapeDtypeStruct((BS, D), jnp.float32),
            jax.ShapeDtypeStruct((BS, n_heads * S), jnp.float32),
        ],
        grid_spec=pltpu.PrefetchScalarGridSpec(
            num_scalar_prefetch=0,
            grid=(1,),                         # tiny problem: single resident step
            in_specs=in_specs,
            out_specs=out_specs,
        ),
        compiler_params=pltpu.CompilerParams(
            dimension_semantics=("arbitrary",)),
    )(*operands)

    out = out2d.reshape(B, S, D)
    attn = attn2d.reshape(B, S, n_heads, S).transpose(0, 2, 1, 3)  # -> [B,H,S,S]
    return out, attn


def init_params(key):
    """Deterministic parameter init (nn.Linear stores weight as [out, in])."""
    ks = jax.random.split(key, 8)
    wq = jax.random.normal(ks[0], (n_heads * d_q, d_model), jnp.float32) * 0.05
    bq = jax.random.normal(ks[1], (n_heads * d_q,), jnp.float32) * 0.05
    wk = jax.random.normal(ks[2], (n_heads * d_k, d_model), jnp.float32) * 0.05
    bk = jax.random.normal(ks[3], (n_heads * d_k,), jnp.float32) * 0.05
    wv = jax.random.normal(ks[4], (n_heads * d_v, d_model), jnp.float32) * 0.05
    bv = jax.random.normal(ks[5], (n_heads * d_v,), jnp.float32) * 0.05
    wo = jax.random.normal(ks[6], (d_model, n_heads * d_v), jnp.float32) * 0.05
    bo = jax.random.normal(ks[7], (d_model,), jnp.float32) * 0.05
    gamma = jnp.ones((d_model,), jnp.float32)
    beta = jnp.zeros((d_model,), jnp.float32)
    return (wq, bq, wk, bk, wv, bv, wo, bo, gamma, beta)


def reference(Q, K, V, attn_mask, params):
    """Pure-JAX f32 reference mirroring the PyTorch forward."""
    wq, bq, wk, bk, wv, bv, wo, bo, gamma, beta = params
    B, S, _ = Q.shape
    q_s = (Q @ wq.T + bq).reshape(B, S, n_heads, d_q).transpose(0, 2, 1, 3)
    k_s = (K @ wk.T + bk).reshape(B, S, n_heads, d_k).transpose(0, 2, 1, 3)
    v_s = (V @ wv.T + bv).reshape(B, S, n_heads, d_v).transpose(0, 2, 1, 3)
    mask = attn_mask[:, None, :, :]
    scores = jnp.einsum("bhqd,bhkd->bhqk", q_s, k_s) / jnp.sqrt(jnp.float32(d_k))
    scores = jnp.where(mask, -1e9, scores)
    attn = jax.nn.softmax(scores, axis=-1)
    ctx = jnp.einsum("bhqk,bhkd->bhqd", attn, v_s).transpose(0, 2, 1, 3).reshape(B, S, -1)
    out = ctx @ wo.T + bo + Q
    mu = out.mean(-1, keepdims=True)
    var = ((out - mu) ** 2).mean(-1, keepdims=True)
    return gamma * (out - mu) / jnp.sqrt(var + 1e-5) + beta, attn


if __name__ == "__main__":
    key = jax.random.PRNGKey(0)
    kq, kk, kv, kp = jax.random.split(key, 4)
    Q = jax.random.normal(kq, (BATCH, SEQ, d_model), jnp.float32)
    K = jax.random.normal(kk, (BATCH, SEQ, d_model), jnp.float32)
    V = jax.random.normal(kv, (BATCH, SEQ, d_model), jnp.float32)
    # upper-triangular (causal-style) boolean mask, True == masked
    attn_mask = jnp.broadcast_to(
        jnp.triu(jnp.ones((SEQ, SEQ), jnp.bool_), k=1), (BATCH, SEQ, SEQ))
    params = init_params(kp)

    out, attn = multi_head_attention(Q, K, V, attn_mask, params)
    jax.block_until_ready((out, attn))

    ref_out, ref_attn = reference(Q, K, V, attn_mask, params)
    # tolerances account for bf16 MXU inputs (f32 accumulation, f32 softmax/LayerNorm)
    assert jnp.allclose(out, ref_out, atol=5e-3), "output mismatch"
    assert jnp.allclose(attn, ref_attn, atol=2e-3), "attn mismatch"

    print("KERNEL_OK")
</pallas_src>

<mosaic_0001>
module attributes {stable_mosaic.version = 11 : i64} {
  func.func @_mha_kernel(%arg0: i32, %arg1: memref<3x16x32xf32, #tpu.memory_space<vmem>>, %arg2: memref<16x8xf32, #tpu.memory_space<vmem>>, %arg3: memref<4x32x32xbf16, #tpu.memory_space<vmem>>, %arg4: memref<6x32xf32, #tpu.memory_space<vmem>>, %arg5: memref<16x32xf32, #tpu.memory_space<vmem>>, %arg6: memref<16x32xf32, #tpu.memory_space<vmem>>) attributes {dimension_semantics = [#tpu.dimension_semantics<arbitrary>], iteration_bounds = array<i64: 1>, scalar_prefetch = 0 : i64, scratch_operands = 0 : i64, tpu.core_type = #tpu.core_type<tc>, window_params = [{pipeline_mode = #tpu.pipeline_mode<synchronous>, transform_indices = @transform_0, window_bounds = array<i64: 3, 16, 32>}, {pipeline_mode = #tpu.pipeline_mode<synchronous>, transform_indices = @transform_1, window_bounds = array<i64: 16, 8>}, {pipeline_mode = #tpu.pipeline_mode<synchronous>, transform_indices = @transform_2, window_bounds = array<i64: 4, 32, 32>}, {pipeline_mode = #tpu.pipeline_mode<synchronous>, transform_indices = @transform_3, window_bounds = array<i64: 6, 32>}, {pipeline_mode = #tpu.pipeline_mode<synchronous>, transform_indices = @transform_4, window_bounds = array<i64: 16, 32>}, {pipeline_mode = #tpu.pipeline_mode<synchronous>, transform_indices = @transform_5, window_bounds = array<i64: 16, 32>}]} {
    %c0 = arith.constant 0 : index
    %c0_0 = arith.constant 0 : index
    %0 = vector.load %arg4[%c0, %c0_0] : memref<6x32xf32, #tpu.memory_space<vmem>>, vector<6x32xf32>
    %c0_1 = arith.constant 0 : index
    %c0_2 = arith.constant 0 : index
    %c0_3 = arith.constant 0 : index
    %1 = vector.load %arg1[%c0_1, %c0_2, %c0_3] : memref<3x16x32xf32, #tpu.memory_space<vmem>>, vector<1x16x32xf32>
    %2 = vector.shape_cast %1 : vector<1x16x32xf32> to vector<16x32xf32>
    %c1 = arith.constant 1 : index
    %c0_4 = arith.constant 0 : index
    %c0_5 = arith.constant 0 : index
    %3 = vector.load %arg1[%c1, %c0_4, %c0_5] : memref<3x16x32xf32, #tpu.memory_space<vmem>>, vector<1x16x32xf32>
    %4 = vector.shape_cast %3 : vector<1x16x32xf32> to vector<16x32xf32>
    %c2 = arith.constant 2 : index
    %c0_6 = arith.constant 0 : index
    %c0_7 = arith.constant 0 : index
    %5 = vector.load %arg1[%c2, %c0_6, %c0_7] : memref<3x16x32xf32, #tpu.memory_space<vmem>>, vector<1x16x32xf32>
    %6 = vector.shape_cast %5 : vector<1x16x32xf32> to vector<16x32xf32>
    %7 = arith.truncf %2 : vector<16x32xf32> to vector<16x32xbf16>
    %c0_8 = arith.constant 0 : index
    %c0_9 = arith.constant 0 : index
    %c0_10 = arith.constant 0 : index
    %8 = vector.load %arg3[%c0_8, %c0_9, %c0_10] : memref<4x32x32xbf16, #tpu.memory_space<vmem>>, vector<1x32x32xbf16>
    %9 = vector.shape_cast %8 : vector<1x32x32xbf16> to vector<32x32xbf16>
    %cst = arith.constant dense<0.000000e+00> : vector<16x32xf32>
    %10 = tpu.matmul %7, %9, %cst {dimension_numbers = #tpu.dot_dimension_numbers<[1], [0], [0], [1], [0, 0, 1, 1], [], []>} : vector<16x32xbf16>, vector<32x32xbf16>, vector<16x32xf32> -> vector<16x32xf32>
    %11 = vector.extract_strided_slice %0 {offsets = [0, 0], sizes = [1, 32], strides = [1, 1]} : vector<6x32xf32> to vector<1x32xf32>
    %12 = vector.broadcast %11 : vector<1x32xf32> to vector<16x32xf32>
    %13 = arith.addf %10, %12 : vector<16x32xf32>
    %14 = arith.truncf %4 : vector<16x32xf32> to vector<16x32xbf16>
    %c1_11 = arith.constant 1 : index
    %c0_12 = arith.constant 0 : index
    %c0_13 = arith.constant 0 : index
    %15 = vector.load %arg3[%c1_11, %c0_12, %c0_13] : memref<4x32x32xbf16, #tpu.memory_space<vmem>>, vector<1x32x32xbf16>
    %16 = vector.shape_cast %15 : vector<1x32x32xbf16> to vector<32x32xbf16>
    %cst_14 = arith.constant dense<0.000000e+00> : vector<16x32xf32>
    %17 = tpu.matmul %14, %16, %cst_14 {dimension_numbers = #tpu.dot_dimension_numbers<[1], [0], [0], [1], [0, 0, 1, 1], [], []>} : vector<16x32xbf16>, vector<32x32xbf16>, vector<16x32xf32> -> vector<16x32xf32>
    %18 = vector.extract_strided_slice %0 {offsets = [1, 0], sizes = [1, 32], strides = [1, 1]} : vector<6x32xf32> to vector<1x32xf32>
    %19 = vector.broadcast %18 : vector<1x32xf32> to vector<16x32xf32>
    %20 = arith.addf %17, %19 : vector<16x32xf32>
    %21 = arith.truncf %6 : vector<16x32xf32> to vector<16x32xbf16>
    %c2_15 = arith.constant 2 : index
    %c0_16 = arith.constant 0 : index
    %c0_17 = arith.constant 0 : index
    %22 = vector.load %arg3[%c2_15, %c0_16, %c0_17] : memref<4x32x32xbf16, #tpu.memory_space<vmem>>, vector<1x32x32xbf16>
    %23 = vector.shape_cast %22 : vector<1x32x32xbf16> to vector<32x32xbf16>
    %cst_18 = arith.constant dense<0.000000e+00> : vector<16x32xf32>
    %24 = tpu.matmul %21, %23, %cst_18 {dimension_numbers = #tpu.dot_dimension_numbers<[1], [0], [0], [1], [0, 0, 1, 1], [], []>} : vector<16x32xbf16>, vector<32x32xbf16>, vector<16x32xf32> -> vector<16x32xf32>
    %25 = vector.extract_strided_slice %0 {offsets = [2, 0], sizes = [1, 32], strides = [1, 1]} : vector<6x32xf32> to vector<1x32xf32>
    %26 = vector.broadcast %25 : vector<1x32xf32> to vector<16x32xf32>
    %27 = arith.addf %24, %26 : vector<16x32xf32>
    %28 = arith.truncf %13 : vector<16x32xf32> to vector<16x32xbf16>
    %29 = arith.truncf %20 : vector<16x32xf32> to vector<16x32xbf16>
    %30 = arith.truncf %27 : vector<16x32xf32> to vector<16x32xbf16>
    %c0_19 = arith.constant 0 : index
    %c0_20 = arith.constant 0 : index
    %31 = vector.load %arg2[%c0_19, %c0_20] : memref<16x8xf32, #tpu.memory_space<vmem>>, vector<16x8xf32>
    %32 = vector.extract_strided_slice %28 {offsets = [0, 0], sizes = [16, 8], strides = [1, 1]} : vector<16x32xbf16> to vector<16x8xbf16>
    %33 = vector.shape_cast %32 : vector<16x8xbf16> to vector<2x8x8xbf16>
    %34 = vector.extract_strided_slice %29 {offsets = [0, 0], sizes = [16, 8], strides = [1, 1]} : vector<16x32xbf16> to vector<16x8xbf16>
    %35 = vector.shape_cast %34 : vector<16x8xbf16> to vector<2x8x8xbf16>
    "tpu.trace_start"() <{level = 10 : i32, message = "bqd,bkd->bqk"}> : () -> ()
    %cst_21 = arith.constant dense<0.000000e+00> : vector<2x8x8xf32>
    %36 = tpu.matmul %33, %35, %cst_21 {dimension_numbers = #tpu.dot_dimension_numbers<[2], [2], [1], [1], [0, 0, 0, 1, 1, 1], [0], [0]>} : vector<2x8x8xbf16>, vector<2x8x8xbf16>, vector<2x8x8xf32> -> vector<2x8x8xf32>
    "tpu.trace_stop"() : () -> ()
    %37 = vector.shape_cast %36 : vector<2x8x8xf32> to vector<16x8xf32>
    %38 = vector.extract_strided_slice %28 {offsets = [0, 8], sizes = [16, 8], strides = [1, 1]} : vector<16x32xbf16> to vector<16x8xbf16>
    %39 = vector.shape_cast %38 : vector<16x8xbf16> to vector<2x8x8xbf16>
    %40 = vector.extract_strided_slice %29 {offsets = [0, 8], sizes = [16, 8], strides = [1, 1]} : vector<16x32xbf16> to vector<16x8xbf16>
    %41 = vector.shape_cast %40 : vector<16x8xbf16> to vector<2x8x8xbf16>
    "tpu.trace_start"() <{level = 10 : i32, message = "bqd,bkd->bqk"}> : () -> ()
    %cst_22 = arith.constant dense<0.000000e+00> : vector<2x8x8xf32>
    %42 = tpu.matmul %39, %41, %cst_22 {dimension_numbers = #tpu.dot_dimension_numbers<[2], [2], [1], [1], [0, 0, 0, 1, 1, 1], [0], [0]>} : vector<2x8x8xbf16>, vector<2x8x8xbf16>, vector<2x8x8xf32> -> vector<2x8x8xf32>
    "tpu.trace_stop"() : () -> ()
    %43 = vector.shape_cast %42 : vector<2x8x8xf32> to vector<16x8xf32>
    %44 = vector.extract_strided_slice %28 {offsets = [0, 16], sizes = [16, 8], strides = [1, 1]} : vector<16x32xbf16> to vector<16x8xbf16>
    %45 = vector.shape_cast %44 : vector<16x8xbf16> to vector<2x8x8xbf16>
    %46 = vector.extract_strided_slice %29 {offsets = [0, 16], sizes = [16, 8], strides = [1, 1]} : vector<16x32xbf16> to vector<16x8xbf16>
    %47 = vector.shape_cast %46 : vector<16x8xbf16> to vector<2x8x8xbf16>
    "tpu.trace_start"() <{level = 10 : i32, message = "bqd,bkd->bqk"}> : () -> ()
    %cst_23 = arith.constant dense<0.000000e+00> : vector<2x8x8xf32>
    %48 = tpu.matmul %45, %47, %cst_23 {dimension_numbers = #tpu.dot_dimension_numbers<[2], [2], [1], [1], [0, 0, 0, 1, 1, 1], [0], [0]>} : vector<2x8x8xbf16>, vector<2x8x8xbf16>, vector<2x8x8xf32> -> vector<2x8x8xf32>
    "tpu.trace_stop"() : () -> ()
    %49 = vector.shape_cast %48 : vector<2x8x8xf32> to vector<16x8xf32>
    %50 = vector.extract_strided_slice %28 {offsets = [0, 24], sizes = [16, 8], strides = [1, 1]} : vector<16x32xbf16> to vector<16x8xbf16>
    %51 = vector.shape_cast %50 : vector<16x8xbf16> to vector<2x8x8xbf16>
    %52 = vector.extract_strided_slice %29 {offsets = [0, 24], sizes = [16, 8], strides = [1, 1]} : vector<16x32xbf16> to vector<16x8xbf16>
    %53 = vector.shape_cast %52 : vector<16x8xbf16> to vector<2x8x8xbf16>
    "tpu.trace_start"() <{level = 10 : i32, message = "bqd,bkd->bqk"}> : () -> ()
    %cst_24 = arith.constant dense<0.000000e+00> : vector<2x8x8xf32>
    %54 = tpu.matmul %51, %53, %cst_24 {dimension_numbers = #tpu.dot_dimension_numbers<[2], [2], [1], [1], [0, 0, 0, 1, 1, 1], [0], [0]>} : vector<2x8x8xbf16>, vector<2x8x8xbf16>, vector<2x8x8xf32> -> vector<2x8x8xf32>
    "tpu.trace_stop"() : () -> ()
    %55 = vector.shape_cast %54 : vector<2x8x8xf32> to vector<16x8xf32>
    %56 = vector.shape_cast %37 : vector<16x8xf32> to vector<1x16x8xf32>
    %57 = vector.shape_cast %43 : vector<16x8xf32> to vector<1x16x8xf32>
    %58 = vector.shape_cast %49 : vector<16x8xf32> to vector<1x16x8xf32>
    %59 = vector.shape_cast %55 : vector<16x8xf32> to vector<1x16x8xf32>
    %60 = tpu.concatenate %56, %57, %58, %59 in 0 : vector<1x16x8xf32>, vector<1x16x8xf32>, vector<1x16x8xf32>, vector<1x16x8xf32> -> vector<4x16x8xf32>
    %61 = vector.shape_cast %31 : vector<16x8xf32> to vector<1x16x8xf32>
    %62 = vector.broadcast %61 : vector<1x16x8xf32> to vector<4x16x8xf32>
    %63 = arith.addf %60, %62 : vector<4x16x8xf32>
    %cst_25 = arith.constant dense<0xFF800000> : vector<4x16xf32>
    %64 = vector.multi_reduction <maximumf>, %63, %cst_25 [2] : vector<4x16x8xf32> to vector<4x16xf32>
    %65 = vector.shape_cast %64 : vector<4x16xf32> to vector<4x16x1xf32>
    %66 = vector.broadcast %65 : vector<4x16x1xf32> to vector<4x16x8xf32>
    %67 = arith.subf %63, %66 : vector<4x16x8xf32>
    %68 = math.exp %67 : vector<4x16x8xf32>
    %cst_26 = arith.constant dense<0.000000e+00> : vector<4x16xf32>
    %69 = vector.multi_reduction <add>, %68, %cst_26 [2] : vector<4x16x8xf32> to vector<4x16xf32>
    %70 = vector.shape_cast %69 : vector<4x16xf32> to vector<4x16x1xf32>
    %71 = vector.broadcast %70 : vector<4x16x1xf32> to vector<4x16x8xf32>
    %72 = arith.divf %68, %71 : vector<4x16x8xf32>
    %73 = vector.extract_strided_slice %72 {offsets = [0, 0, 0], sizes = [1, 16, 8], strides = [1, 1, 1]} : vector<4x16x8xf32> to vector<1x16x8xf32>
    %74 = vector.shape_cast %73 : vector<1x16x8xf32> to vector<16x8xf32>
    %75 = vector.extract_strided_slice %72 {offsets = [1, 0, 0], sizes = [1, 16, 8], strides = [1, 1, 1]} : vector<4x16x8xf32> to vector<1x16x8xf32>
    %76 = vector.shape_cast %75 : vector<1x16x8xf32> to vector<16x8xf32>
    %77 = vector.extract_strided_slice %72 {offsets = [2, 0, 0], sizes = [1, 16, 8], strides = [1, 1, 1]} : vector<4x16x8xf32> to vector<1x16x8xf32>
    %78 = vector.shape_cast %77 : vector<1x16x8xf32> to vector<16x8xf32>
    %79 = vector.extract_strided_slice %72 {offsets = [3, 0, 0], sizes = [1, 16, 8], strides = [1, 1, 1]} : vector<4x16x8xf32> to vector<1x16x8xf32>
    %80 = vector.shape_cast %79 : vector<1x16x8xf32> to vector<16x8xf32>
    %81 = tpu.concatenate %74, %76, %78, %80 in 1 : vector<16x8xf32>, vector<16x8xf32>, vector<16x8xf32>, vector<16x8xf32> -> vector<16x32xf32>
    %c0_27 = arith.constant 0 : index
    %c0_28 = arith.constant 0 : index
    %82 = vector.load %arg6[%c0_27, %c0_28] : memref<16x32xf32, #tpu.memory_space<vmem>>, vector<16x32xf32>
    tpu.vector_store %arg6[%c0_27, %c0_28], %81 {strides = array<i32>} : memref<16x32xf32, #tpu.memory_space<vmem>>, vector<16x32xf32>,
    %83 = arith.truncf %72 : vector<4x16x8xf32> to vector<4x16x8xbf16>
    %84 = vector.extract_strided_slice %83 {offsets = [0, 0, 0], sizes = [1, 16, 8], strides = [1, 1, 1]} : vector<4x16x8xbf16> to vector<1x16x8xbf16>
    %85 = vector.shape_cast %84 : vector<1x16x8xbf16> to vector<16x8xbf16>
    %86 = vector.shape_cast %85 : vector<16x8xbf16> to vector<2x8x8xbf16>
    %87 = vector.extract_strided_slice %30 {offsets = [0, 0], sizes = [16, 8], strides = [1, 1]} : vector<16x32xbf16> to vector<16x8xbf16>
    %88 = vector.shape_cast %87 : vector<16x8xbf16> to vector<2x8x8xbf16>
    "tpu.trace_start"() <{level = 10 : i32, message = "bqk,bkd->bqd"}> : () -> ()
    %cst_29 = arith.constant dense<0.000000e+00> : vector<2x8x8xf32>
    %89 = tpu.matmul %86, %88, %cst_29 {dimension_numbers = #tpu.dot_dimension_numbers<[2], [1], [1], [2], [0, 0, 0, 1, 1, 2], [0], [0]>} : vector<2x8x8xbf16>, vector<2x8x8xbf16>, vector<2x8x8xf32> -> vector<2x8x8xf32>
    "tpu.trace_stop"() : () -> ()
    %90 = vector.shape_cast %89 : vector<2x8x8xf32> to vector<16x8xf32>
    %91 = vector.extract_strided_slice %83 {offsets = [1, 0, 0], sizes = [1, 16, 8], strides = [1, 1, 1]} : vector<4x16x8xbf16> to vector<1x16x8xbf16>
    %92 = vector.shape_cast %91 : vector<1x16x8xbf16> to vector<16x8xbf16>
    %93 = vector.shape_cast %92 : vector<16x8xbf16> to vector<2x8x8xbf16>
    %94 = vector.extract_strided_slice %30 {offsets = [0, 8], sizes = [16, 8], strides = [1, 1]} : vector<16x32xbf16> to vector<16x8xbf16>
    %95 = vector.shape_cast %94 : vector<16x8xbf16> to vector<2x8x8xbf16>
    "tpu.trace_start"() <{level = 10 : i32, message = "bqk,bkd->bqd"}> : () -> ()
    %cst_30 = arith.constant dense<0.000000e+00> : vector<2x8x8xf32>
    %96 = tpu.matmul %93, %95, %cst_30 {dimension_numbers = #tpu.dot_dimension_numbers<[2], [1], [1], [2], [0, 0, 0, 1, 1, 2], [0], [0]>} : vector<2x8x8xbf16>, vector<2x8x8xbf16>, vector<2x8x8xf32> -> vector<2x8x8xf32>
    "tpu.trace_stop"() : () -> ()
    %97 = vector.shape_cast %96 : vector<2x8x8xf32> to vector<16x8xf32>
    %98 = vector.extract_strided_slice %83 {offsets = [2, 0, 0], sizes = [1, 16, 8], strides = [1, 1, 1]} : vector<4x16x8xbf16> to vector<1x16x8xbf16>
    %99 = vector.shape_cast %98 : vector<1x16x8xbf16> to vector<16x8xbf16>
    %100 = vector.shape_cast %99 : vector<16x8xbf16> to vector<2x8x8xbf16>
    %101 = vector.extract_strided_slice %30 {offsets = [0, 16], sizes = [16, 8], strides = [1, 1]} : vector<16x32xbf16> to vector<16x8xbf16>
    %102 = vector.shape_cast %101 : vector<16x8xbf16> to vector<2x8x8xbf16>
    "tpu.trace_start"() <{level = 10 : i32, message = "bqk,bkd->bqd"}> : () -> ()
    %cst_31 = arith.constant dense<0.000000e+00> : vector<2x8x8xf32>
    %103 = tpu.matmul %100, %102, %cst_31 {dimension_numbers = #tpu.dot_dimension_numbers<[2], [1], [1], [2], [0, 0, 0, 1, 1, 2], [0], [0]>} : vector<2x8x8xbf16>, vector<2x8x8xbf16>, vector<2x8x8xf32> -> vector<2x8x8xf32>
    "tpu.trace_stop"() : () -> ()
    %104 = vector.shape_cast %103 : vector<2x8x8xf32> to vector<16x8xf32>
    %105 = vector.extract_strided_slice %83 {offsets = [3, 0, 0], sizes = [1, 16, 8], strides = [1, 1, 1]} : vector<4x16x8xbf16> to vector<1x16x8xbf16>
    %106 = vector.shape_cast %105 : vector<1x16x8xbf16> to vector<16x8xbf16>
    %107 = vector.shape_cast %106 : vector<16x8xbf16> to vector<2x8x8xbf16>
    %108 = vector.extract_strided_slice %30 {offsets = [0, 24], sizes = [16, 8], strides = [1, 1]} : vector<16x32xbf16> to vector<16x8xbf16>
    %109 = vector.shape_cast %108 : vector<16x8xbf16> to vector<2x8x8xbf16>
    "tpu.trace_start"() <{level = 10 : i32, message = "bqk,bkd->bqd"}> : () -> ()
    %cst_32 = arith.constant dense<0.000000e+00> : vector<2x8x8xf32>
    %110 = tpu.matmul %107, %109, %cst_32 {dimension_numbers = #tpu.dot_dimension_numbers<[2], [1], [1], [2], [0, 0, 0, 1, 1, 2], [0], [0]>} : vector<2x8x8xbf16>, vector<2x8x8xbf16>, vector<2x8x8xf32> -> vector<2x8x8xf32>
    "tpu.trace_stop"() : () -> ()
    %111 = vector.shape_cast %110 : vector<2x8x8xf32> to vector<16x8xf32>
    %112 = tpu.concatenate %90, %97, %104, %111 in 1 : vector<16x8xf32>, vector<16x8xf32>, vector<16x8xf32>, vector<16x8xf32> -> vector<16x32xf32>
    %113 = arith.truncf %112 : vector<16x32xf32> to vector<16x32xbf16>
    %c3 = arith.constant 3 : index
    %c0_33 = arith.constant 0 : index
    %c0_34 = arith.constant 0 : index
    %114 = vector.load %arg3[%c3, %c0_33, %c0_34] : memref<4x32x32xbf16, #tpu.memory_space<vmem>>, vector<1x32x32xbf16>
    %115 = vector.shape_cast %114 : vector<1x32x32xbf16> to vector<32x32xbf16>
    %cst_35 = arith.constant dense<0.000000e+00> : vector<16x32xf32>
    %116 = tpu.matmul %113, %115, %cst_35 {dimension_numbers = #tpu.dot_dimension_numbers<[1], [0], [0], [1], [0, 0, 1, 1], [], []>} : vector<16x32xbf16>, vector<32x32xbf16>, vector<16x32xf32> -> vector<16x32xf32>
    %117 = vector.extract_strided_slice %0 {offsets = [3, 0], sizes = [1, 32], strides = [1, 1]} : vector<6x32xf32> to vector<1x32xf32>
    %118 = vector.broadcast %117 : vector<1x32xf32> to vector<16x32xf32>
    %119 = arith.addf %116, %118 : vector<16x32xf32>
    %120 = arith.addf %119, %2 : vector<16x32xf32>
    %cst_36 = arith.constant dense<0.000000e+00> : vector<16xf32>
    %121 = vector.multi_reduction <add>, %120, %cst_36 [1] : vector<16x32xf32> to vector<16xf32>
    %122 = vector.shape_cast %121 : vector<16xf32> to vector<16x1xf32>
    %cst_37 = arith.constant 3.200000e+01 : f32
    %123 = vector.broadcast %cst_37 : f32 to vector<16x1xf32>
    %124 = arith.divf %122, %123 : vector<16x1xf32>
    %125 = vector.broadcast %124 : vector<16x1xf32> to vector<16x32xf32>
    %126 = arith.subf %120, %125 : vector<16x32xf32>
    %127 = arith.mulf %126, %126 : vector<16x32xf32>
    %cst_38 = arith.constant dense<0.000000e+00> : vector<16xf32>
    %128 = vector.multi_reduction <add>, %127, %cst_38 [1] : vector<16x32xf32> to vector<16xf32>
    %129 = vector.shape_cast %128 : vector<16xf32> to vector<16x1xf32>
    %cst_39 = arith.constant 3.200000e+01 : f32
    %130 = vector.broadcast %cst_39 : f32 to vector<16x1xf32>
    %131 = arith.divf %129, %130 : vector<16x1xf32>
    %132 = vector.broadcast %124 : vector<16x1xf32> to vector<16x32xf32>
    %133 = arith.subf %120, %132 : vector<16x32xf32>
    %cst_40 = arith.constant 9.99999974E-6 : f32
    %134 = vector.broadcast %cst_40 : f32 to vector<16x1xf32>
    %135 = arith.addf %131, %134 : vector<16x1xf32>
    %136 = math.rsqrt %135 : vector<16x1xf32>
    %137 = vector.broadcast %136 : vector<16x1xf32> to vector<16x32xf32>
    %138 = arith.mulf %133, %137 : vector<16x32xf32>
    %139 = vector.extract_strided_slice %0 {offsets = [4, 0], sizes = [1, 32], strides = [1, 1]} : vector<6x32xf32> to vector<1x32xf32>
    %140 = vector.broadcast %139 : vector<1x32xf32> to vector<16x32xf32>
    %141 = arith.mulf %138, %140 : vector<16x32xf32>
    %142 = vector.extract_strided_slice %0 {offsets = [5, 0], sizes = [1, 32], strides = [1, 1]} : vector<6x32xf32> to vector<1x32xf32>
    %143 = vector.broadcast %142 : vector<1x32xf32> to vector<16x32xf32>
    %144 = arith.addf %141, %143 : vector<16x32xf32>
    %c0_41 = arith.constant 0 : index
    %c0_42 = arith.constant 0 : index
    %145 = vector.load %arg5[%c0_41, %c0_42] : memref<16x32xf32, #tpu.memory_space<vmem>>, vector<16x32xf32>
    tpu.vector_store %arg5[%c0_41, %c0_42], %144 {strides = array<i32>} : memref<16x32xf32, #tpu.memory_space<vmem>>, vector<16x32xf32>,
    return
  }
  func.func @transform_0(%arg0: i32) -> (i32, i32, i32) {
    %c0_i32 = arith.constant 0 : i32
    %c0_i32_0 = arith.constant 0 : i32
    %c0_i32_1 = arith.constant 0 : i32
    %c0_i32_2 = arith.constant 0 : i32
    return %c0_i32, %c0_i32_0, %c0_i32_1 : i32, i32, i32
  }
  func.func @transform_1(%arg0: i32) -> (i32, i32) {
    %c0_i32 = arith.constant 0 : i32
    %c0_i32_0 = arith.constant 0 : i32
    %c0_i32_1 = arith.constant 0 : i32
    return %c0_i32, %c0_i32_0 : i32, i32
  }
  func.func @transform_2(%arg0: i32) -> (i32, i32, i32) {
    %c0_i32 = arith.constant 0 : i32
    %c0_i32_0 = arith.constant 0 : i32
    %c0_i32_1 = arith.constant 0 : i32
    %c0_i32_2 = arith.constant 0 : i32
    return %c0_i32, %c0_i32_0, %c0_i32_1 : i32, i32, i32
  }
  func.func @transform_3(%arg0: i32) -> (i32, i32) {
    %c0_i32 = arith.constant 0 : i32
    %c0_i32_0 = arith.constant 0 : i32
    %c0_i32_1 = arith.constant 0 : i32
    return %c0_i32, %c0_i32_0 : i32, i32
  }
  func.func @transform_4(%arg0: i32) -> (i32, i32) {
    %c0_i32 = arith.constant 0 : i32
    %c0_i32_0 = arith.constant 0 : i32
    %c0_i32_1 = arith.constant 0 : i32
    return %c0_i32, %c0_i32_0 : i32, i32
  }
  func.func @transform_5(%arg0: i32) -> (i32, i32) {
    %c0_i32 = arith.constant 0 : i32
    %c0_i32_0 = arith.constant 0 : i32
    %c0_i32_1 = arith.constant 0 : i32
    return %c0_i32, %c0_i32_0 : i32, i32
  }
}

</mosaic_0001>

<llo_original>
// kernel: tpu_custom_call.1
$region0: #{tpu_custom_call.1}
  #allocation0 [shape = 'u32[]', space=smem, size = 0x4, offset = 0x4, fixed_abs, tag = 'smem constant byte address 0x4 - core index']
  #allocation1 [shape = 'u32[144,128]{1,0:T(1,128)}', space=vmem, size = 0x12000, scoped, tag = 'internal scratch']
  %s0 = inlined_call_operand.hbm [shape: f32[3,16,32], index: 0, kind: input, shape index: {}]
  %s1 = inlined_call_operand.vmem [shape: f32[16,8], index: 1, kind: input, shape index: {}]
  %s2 = inlined_call_operand.hbm [shape: bf16[4,32,32], index: 2, kind: input, shape index: {}]
  %s3 = inlined_call_operand.vmem [shape: f32[6,32], index: 3, kind: input, shape index: {}]
  %s4 = inlined_call_operand.hbm [shape: f32[16,32], index: 4, kind: output, shape index: {0}]
  %s5 = inlined_call_operand.hbm [shape: f32[16,32], index: 5, kind: output, shape index: {1}]
  %6 = xla_tuple %s4, %s5
  %s7 = sld [smem:[#allocation0]]
  $region42: #{tpu_custom_call.1} parent=0
    _
  %s9 = ssub.s32 1, %s7
  %s10 = scalar_select 0, %s9, %s7
  $region1: #{tpu_custom_call.1} parent=0
    #allocation2 [shape = 'u8[24576]{0}', space=vmem, size = 0x6000, scoped, tag = 'input window, operand 0, single buffered']
    #allocation3 [shape = 's32[1]{0}', space=sflag, size = 0x4, scoped, tag = 'scoped memory for tpu_custom_call.1']
    #allocation4 [shape = 's32[1]{0}', space=sflag, size = 0x4, scoped, tag = 'scoped memory for tpu_custom_call.1']
    #allocation5 [shape = 'u8[32768]{0}', space=vmem, size = 0x8000, scoped, tag = 'input window, operand 2, single buffered']
    #allocation6 [shape = 's32[1]{0}', space=sflag, size = 0x4, scoped, tag = 'scoped memory for tpu_custom_call.1']
    #allocation7 [shape = 'u8[8192]{0}', space=vmem, size = 0x2000, scoped, tag = 'output window, operand 0, single buffered']
    #allocation8 [shape = 'u8[8192]{0}', space=vmem, size = 0x2000, scoped, tag = 'output window, operand 1, single buffered']
    #allocation9 [shape = 's32[1]{0}', space=sflag, size = 0x4, scoped, tag = 'scoped memory for tpu_custom_call.1']
    %11 = vsyncpa [#allocation3], 0
    %12 = vsyncpa [#allocation6], 0
    %13 = vsyncpa [#allocation4], 0
    %14 = vsyncpa [#allocation9], 0
    // Predicated region
    $region2: #{tpu_custom_call.1} parent=1 // pred_check
      _
    $region3: #{tpu_custom_call.1} parent=1 // pred_check_branch
      %16 = sbr.rel (0) target = $region5
    $region4: #{tpu_custom_call.1} parent=1 // pred_region
      %s18 = ssub.s32 768, 768
      %19 = vsyncadd [#allocation3], %s18
      %s20 = sshll.u32 [#allocation2], 4
      %s21 = int_to_ptr.vmem [resolvable:$true] %s20
      %26 = dma.hbm_to_vmem [thread:$0]  %s0, 768, %s21, [#allocation3], 128, 128, 8
    $region5: #{tpu_custom_call.1} parent=1 // pred_fallthru
      _
    // Predicated region
    $region6: #{tpu_custom_call.1} parent=1 // pred_check
      _
    $region7: #{tpu_custom_call.1} parent=1 // pred_check_branch
      %28 = sbr.rel (0) target = $region9
    $region8: #{tpu_custom_call.1} parent=1 // pred_region
      _
    $region9: #{tpu_custom_call.1} parent=1 // pred_fallthru
      _
    // Predicated region
    $region10: #{tpu_custom_call.1} parent=1 // pred_check
      _
    $region11: #{tpu_custom_call.1} parent=1 // pred_check_branch
      %30 = sbr.rel (0) target = $region13
    $region12: #{tpu_custom_call.1} parent=1 // pred_region
      %s32 = ssub.s32 1024, 1024
      %33 = vsyncadd [#allocation6], %s32
      %s34 = sshll.u32 [#allocation5], 4
      %s35 = int_to_ptr.vmem [resolvable:$true] %s34
      %40 = dma.hbm_to_vmem [thread:$0]  %s2, 1024, %s35, [#allocation6], 64, 64, 4
    $region13: #{tpu_custom_call.1} parent=1 // pred_fallthru
      _
    // Predicated region
    $region14: #{tpu_custom_call.1} parent=1 // pred_check
      _
    $region15: #{tpu_custom_call.1} parent=1 // pred_check_branch
      %42 = sbr.rel (0) target = $region17
    $region16: #{tpu_custom_call.1} parent=1 // pred_region
      _
    $region17: #{tpu_custom_call.1} parent=1 // pred_fallthru
      _
    // Predicated region
    $region18: #{tpu_custom_call.1} parent=1 // pred_check
      _
    $region19: #{tpu_custom_call.1} parent=1 // pred_check_branch
      %44 = sbr.rel (0) target = $region21
    $region20: #{tpu_custom_call.1} parent=1 // pred_region
      %45 = dma.done [#allocation3], 768
    $region21: #{tpu_custom_call.1} parent=1 // pred_fallthru
      _
    // Predicated region
    $region22: #{tpu_custom_call.1} parent=1 // pred_check
      _
    $region23: #{tpu_custom_call.1} parent=1 // pred_check_branch
      %47 = sbr.rel (0) target = $region25
    $region24: #{tpu_custom_call.1} parent=1 // pred_region
      %48 = dma.done [#allocation6], 1024
    $region25: #{tpu_custom_call.1} parent=1 // pred_fallthru
      _
    %v50 = vld [vmem:[%s3] sm:$0x3f]
    %v51 = vld [vmem:[#allocation2] sm:$0xff]
    %v52 = vld [vmem:[#allocation2 + $0x8] sm:$0xff]
    %s53 = scalar_lea.vmem [#allocation2], 16
    %v54 = vld [vmem:[%s53] sm:$0xff]
    %v55 = vld [vmem:[%s53 + $0x8] sm:$0xff]
    %s56 = scalar_lea.vmem [#allocation2], 32
    %v57 = vld [vmem:[%s56] sm:$0xff]
    %v58 = vld [vmem:[%s56 + $0x8] sm:$0xff]
    %v59 = vpack.c.bf16 %v52, %v51
    %v60 = vld [vmem:[#allocation5] sm:$0xf]
    %v61 = vld [vmem:[#allocation5 + $0x4] sm:$0xf]
    %v62 = vld [vmem:[#allocation5 + $0x8] sm:$0xf]
    %v63 = vld [vmem:[#allocation5 + $0xc] sm:$0xf]
    %v64 = vlaneseq
    %v65 = vshrl.u32 %v64, 7
    %v66 = vsub.s32 0, %v65
    %v67 = vrot.slane %v50, %v66
    %v72 = vunpack.c.l.b16 %v60
    %v73 = vunpack.c.l.b16 %v61
    %v74 = vunpack.c.l.b16 %v62
    %v75 = vunpack.c.l.b16 %v63
    %v76 = vpack.c.b16 %v73, %v72
    %v77 = vpack.c.b16 %v75, %v74
    %vm80 = vcmask 261120
    %v82 = vsel %vm80, %v59, 0
    %84 = vmatprep.subr.bf16.mxu0 0
    %85 = vmatpush1.bf16.msra.mxu0 0
    %86 = vmatprep.subr.bf16.mxu0 0
    %87 = vmatpush1.bf16.msra.mxu0 0
    %88 = vmatprep.subr.bf16.mxu0 0
    %89 = vmatpush1.bf16.msra.mxu0 0
    %90 = vmatprep.subr.bf16.mxu0 0
    %91 = vmatpush1.bf16.msra.mxu0 0
    %92 = vmatprep.subr.bf16.mxu0 0
    %93 = vmatpush1.bf16.msra.mxu0 0
    %94 = vmatprep.subr.bf16.mxu0 0
    %95 = vmatpush1.bf16.msra.mxu0 0
    %96 = vmatprep.subr.bf16.mxu0 0
    %97 = vmatpush1.bf16.msra.mxu0 %v77
    %98 = vmatprep.subr.bf16.mxu0 0
    %99 = vmatpush1.bf16.msra.mxu0 %v76
    %100 = vmatprep.subr.bf16.mxu0 0
    %101 = vmatpush2.bf16.msra.mxu0 0
    %102 = vmatprep.subr.bf16.mxu0 0
    %103 = vmatpush2.bf16.msra.mxu0 0
    %104 = vmatprep.subr.bf16.mxu0 0
    %105 = vmatpush2.bf16.msra.mxu0 0
    %106 = vmatprep.subr.bf16.mxu0 0
    %107 = vmatpush2.bf16.msra.mxu0 0
    %108 = vmatprep.subr.bf16.mxu0 0
    %109 = vmatpush2.bf16.msra.mxu0 0
    %110 = vmatprep.subr.bf16.mxu0 0
    %111 = vmatpush2.bf16.msra.mxu0 0
    %112 = vmatprep.subr.bf16.mxu0 0
    %113 = vmatpush2.bf16.msra.mxu0 0
    %114 = vmatprep.subr.bf16.mxu0 0
    %115 = vmatpush2.bf16.msra.mxu0 0
    %116 = vmatprep.mubr.bf16.mxu0 0
    %117 = vmatmul.mubr.bf16.gmra.mxu0 %v82
    %v118 = vpop.f32.mrf.mxu0
    %v119 = vadd.f32 %v67, %v118
    %v120 = vpop.f32.mrf.mxu0
    %v121 = vpop.f32.mrf.mxu0
    %v122 = vadd.f32 %v67, %v121
    %v123 = vpop.f32.mrf.mxu0
    %124 = vdwg.mxu0
    %v125 = vpack.c.bf16 %v55, %v54
    %s126 = scalar_lea.vmem [#allocation5], 16
    %v127 = vld [vmem:[%s126] sm:$0xf]
    %v128 = vld [vmem:[%s126 + $0x4] sm:$0xf]
    %v129 = vld [vmem:[%s126 + $0x8] sm:$0xf]
    %v130 = vld [vmem:[%s126 + $0xc] sm:$0xf]
    %v131 = vlaneseq
    %v132 = vshrl.u32 %v131, 7
    %v133 = vsub.s32 1, %v132
    %v134 = vrot.slane %v50, %v133
    %v139 = vunpack.c.l.b16 %v127
    %v140 = vunpack.c.l.b16 %v128
    %v141 = vunpack.c.l.b16 %v129
    %v142 = vunpack.c.l.b16 %v130
    %v143 = vpack.c.b16 %v140, %v139
    %v144 = vpack.c.b16 %v142, %v141
    %v148 = vsel %vm80, %v125, 0
    %150 = vmatprep.subr.bf16.mxu0 0
    %151 = vmatpush1.bf16.msra.mxu0 0
    %152 = vmatprep.subr.bf16.mxu0 0
    %153 = vmatpush1.bf16.msra.mxu0 0
    %154 = vmatprep.subr.bf16.mxu0 0
    %155 = vmatpush1.bf16.msra.mxu0 0
    %156 = vmatprep.subr.bf16.mxu0 0
    %157 = vmatpush1.bf16.msra.mxu0 0
    %158 = vmatprep.subr.bf16.mxu0 0
    %159 = vmatpush1.bf16.msra.mxu0 0
    %160 = vmatprep.subr.bf16.mxu0 0
    %161 = vmatpush1.bf16.msra.mxu0 0
    %162 = vmatprep.subr.bf16.mxu0 0
    %163 = vmatpush1.bf16.msra.mxu0 %v144
    %164 = vmatprep.subr.bf16.mxu0 0
    %165 = vmatpush1.bf16.msra.mxu0 %v143
    %166 = vmatprep.subr.bf16.mxu0 0
    %167 = vmatpush2.bf16.msra.mxu0 0
    %168 = vmatprep.subr.bf16.mxu0 0
    %169 = vmatpush2.bf16.msra.mxu0 0
    %170 = vmatprep.subr.bf16.mxu0 0
    %171 = vmatpush2.bf16.msra.mxu0 0
    %172 = vmatprep.subr.bf16.mxu0 0
    %173 = vmatpush2.bf16.msra.mxu0 0
    %174 = vmatprep.subr.bf16.mxu0 0
    %175 = vmatpush2.bf16.msra.mxu0 0
    %176 = vmatprep.subr.bf16.mxu0 0
    %177 = vmatpush2.bf16.msra.mxu0 0
    %178 = vmatprep.subr.bf16.mxu0 0
    %179 = vmatpush2.bf16.msra.mxu0 0
    %180 = vmatprep.subr.bf16.mxu0 0
    %181 = vmatpush2.bf16.msra.mxu0 0
    %182 = vmatprep.mubr.bf16.mxu0 0
    %183 = vmatmul.mubr.bf16.gmra.mxu0 %v148
    %v184 = vpop.f32.mrf.mxu0
    %v185 = vadd.f32 %v134, %v184
    %v186 = vpop.f32.mrf.mxu0
    %v187 = vpop.f32.mrf.mxu0
    %v188 = vadd.f32 %v134, %v187
    %v189 = vpop.f32.mrf.mxu0
    %190 = vdwg.mxu0
    %v191 = vpack.c.bf16 %v58, %v57
    %s192 = scalar_lea.vmem [#allocation5], 32
    %v193 = vld [vmem:[%s192] sm:$0xf]
    %v194 = vld [vmem:[%s192 + $0x4] sm:$0xf]
    %v195 = vld [vmem:[%s192 + $0x8] sm:$0xf]
    %v196 = vld [vmem:[%s192 + $0xc] sm:$0xf]
    %v197 = vlaneseq
    %v198 = vshrl.u32 %v197, 7
    %v199 = vsub.s32 2, %v198
    %v200 = vrot.slane %v50, %v199
    %v205 = vunpack.c.l.b16 %v193
    %v206 = vunpack.c.l.b16 %v194
    %v207 = vunpack.c.l.b16 %v195
    %v208 = vunpack.c.l.b16 %v196
    %v209 = vpack.c.b16 %v206, %v205
    %v210 = vpack.c.b16 %v208, %v207
    %v214 = vsel %vm80, %v191, 0
    %216 = vmatprep.subr.bf16.mxu0 0
    %217 = vmatpush1.bf16.msra.mxu0 0
    %218 = vmatprep.subr.bf16.mxu0 0
    %219 = vmatpush1.bf16.msra.mxu0 0
    %220 = vmatprep.subr.bf16.mxu0 0
    %221 = vmatpush1.bf16.msra.mxu0 0
    %222 = vmatprep.subr.bf16.mxu0 0
    %223 = vmatpush1.bf16.msra.mxu0 0
    %224 = vmatprep.subr.bf16.mxu0 0
    %225 = vmatpush1.bf16.msra.mxu0 0
    %226 = vmatprep.subr.bf16.mxu0 0
    %227 = vmatpush1.bf16.msra.mxu0 0
    %228 = vmatprep.subr.bf16.mxu0 0
    %229 = vmatpush1.bf16.msra.mxu0 %v210
    %230 = vmatprep.subr.bf16.mxu0 0
    %231 = vmatpush1.bf16.msra.mxu0 %v209
    %232 = vmatprep.subr.bf16.mxu0 0
    %233 = vmatpush2.bf16.msra.mxu0 0
    %234 = vmatprep.subr.bf16.mxu0 0
    %235 = vmatpush2.bf16.msra.mxu0 0
    %236 = vmatprep.subr.bf16.mxu0 0
    %237 = vmatpush2.bf16.msra.mxu0 0
    %238 = vmatprep.subr.bf16.mxu0 0
    %239 = vmatpush2.bf16.msra.mxu0 0
    %240 = vmatprep.subr.bf16.mxu0 0
    %241 = vmatpush2.bf16.msra.mxu0 0
    %242 = vmatprep.subr.bf16.mxu0 0
    %243 = vmatpush2.bf16.msra.mxu0 0
    %244 = vmatprep.subr.bf16.mxu0 0
    %245 = vmatpush2.bf16.msra.mxu0 0
    %246 = vmatprep.subr.bf16.mxu0 0
    %247 = vmatpush2.bf16.msra.mxu0 0
    %248 = vmatprep.mubr.bf16.mxu0 0
    %249 = vmatmul.mubr.bf16.gmra.mxu0 %v214
    %v250 = vpop.f32.mrf.mxu0
    %v251 = vadd.f32 %v200, %v250
    %v252 = vpop.f32.mrf.mxu0
    %v253 = vpop.f32.mrf.mxu0
    %v254 = vadd.f32 %v200, %v253
    %v255 = vpop.f32.mrf.mxu0
    %256 = vdwg.mxu0
    %v257 = vpack.c.bf16 %v122, %v119
    %v258 = vpack.c.bf16 %v188, %v185
    %v259 = vpack.c.bf16 %v254, %v251
    %v260 = vld [vmem:[%s1] sm:$0xff]
    %v261 = vld [vmem:[%s1 + $0x8] sm:$0xff]
    %v263 = vunpack.c.l.b16 %v257
    %v264 = vunpack.c.h.b16 %v257
    %v265 = vpack.c.b16 %v263, %v263
    %v266 = vpack.c.b16 %v264, %v264
    %v268 = vunpack.c.l.b16 %v258
    %v269 = vunpack.c.h.b16 %v258
    %v270 = vpack.c.b16 %v268, %v268
    %v271 = vpack.c.b16 %v269, %v269
    %vm272 = vcmask 64512
    %v274 = vsel %vm272, %v265, 0
    %v277 = vsel %vm272, %v270, 0
    %279 = vmatprep.subr.bf16.mxu0 0
    %280 = vmatpush1.bf16.xpose.msra.mxu0 0
    %281 = vmatprep.subr.bf16.mxu0 0
    %282 = vmatpush1.bf16.xpose.msra.mxu0 0
    %283 = vmatprep.subr.bf16.mxu0 0
    %284 = vmatpush1.bf16.xpose.msra.mxu0 0
    %285 = vmatprep.subr.bf16.mxu0 0
    %286 = vmatpush1.bf16.xpose.msra.mxu0 0
    %287 = vmatprep.subr.bf16.mxu0 0
    %288 = vmatpush1.bf16.xpose.msra.mxu0 0
    %289 = vmatprep.subr.bf16.mxu0 0
    %290 = vmatpush1.bf16.xpose.msra.mxu0 0
    %291 = vmatprep.subr.bf16.mxu0 0
    %292 = vmatpush1.bf16.xpose.msra.mxu0 0
    %293 = vmatprep.subr.bf16.mxu0 0
    %294 = vmatpush1.bf16.xpose.msra.mxu0 %v277
    %295 = vmatprep.subr.bf16.mxu0 0
    %296 = vmatpush2.bf16.xpose.msra.mxu0 0
    %297 = vmatprep.subr.bf16.mxu0 0
    %298 = vmatpush2.bf16.xpose.msra.mxu0 0
    %299 = vmatprep.subr.bf16.mxu0 0
    %300 = vmatpush2.bf16.xpose.msra.mxu0 0
    %301 = vmatprep.subr.bf16.mxu0 0
    %302 = vmatpush2.bf16.xpose.msra.mxu0 0
    %303 = vmatprep.subr.bf16.mxu0 0
    %304 = vmatpush2.bf16.xpose.msra.mxu0 0
    %305 = vmatprep.subr.bf16.mxu0 0
    %306 = vmatpush2.bf16.xpose.msra.mxu0 0
    %307 = vmatprep.subr.bf16.mxu0 0
    %308 = vmatpush2.bf16.xpose.msra.mxu0 0
    %309 = vmatprep.subr.bf16.mxu0 0
    %310 = vmatpush2.bf16.xpose.msra.mxu0 0
    %311 = vmatprep.mubr.bf16.mxu0 0
    %312 = vmatmul.mubr.bf16.gmra.mxu0 %v274
    %v313 = vpop.f32.mrf.mxu0
    %v314 = vadd.f32 0.0, %v313
    %v315 = vpop.f32.mrf.mxu0
    %v316 = vpop.f32.mrf.mxu0
    %v317 = vpop.f32.mrf.mxu0
    %318 = vdwg.mxu0
    %v320 = vsel %vm272, %v266, 0
    %v323 = vsel %vm272, %v271, 0
    %325 = vmatprep.subr.bf16.mxu0 0
    %326 = vmatpush1.bf16.xpose.msra.mxu0 0
    %327 = vmatprep.subr.bf16.mxu0 0
    %328 = vmatpush1.bf16.xpose.msra.mxu0 0
    %329 = vmatprep.subr.bf16.mxu0 0
    %330 = vmatpush1.bf16.xpose.msra.mxu0 0
    %331 = vmatprep.subr.bf16.mxu0 0
    %332 = vmatpush1.bf16.xpose.msra.mxu0 0
    %333 = vmatprep.subr.bf16.mxu0 0
    %334 = vmatpush1.bf16.xpose.msra.mxu0 0
    %335 = vmatprep.subr.bf16.mxu0 0
    %336 = vmatpush1.bf16.xpose.msra.mxu0 0
    %337 = vmatprep.subr.bf16.mxu0 0
    %338 = vmatpush1.bf16.xpose.msra.mxu0 0
    %339 = vmatprep.subr.bf16.mxu0 0
    %340 = vmatpush1.bf16.xpose.msra.mxu0 %v323
    %341 = vmatprep.subr.bf16.mxu0 0
    %342 = vmatpush2.bf16.xpose.msra.mxu0 0
    %343 = vmatprep.subr.bf16.mxu0 0
    %344 = vmatpush2.bf16.xpose.msra.mxu0 0
    %345 = vmatprep.subr.bf16.mxu0 0
    %346 = vmatpush2.bf16.xpose.msra.mxu0 0
    %347 = vmatprep.subr.bf16.mxu0 0
    %348 = vmatpush2.bf16.xpose.msra.mxu0 0
    %349 = vmatprep.subr.bf16.mxu0 0
    %350 = vmatpush2.bf16.xpose.msra.mxu0 0
    %351 = vmatprep.subr.bf16.mxu0 0
    %352 = vmatpush2.bf16.xpose.msra.mxu0 0
    %353 = vmatprep.subr.bf16.mxu0 0
    %354 = vmatpush2.bf16.xpose.msra.mxu0 0
    %355 = vmatprep.subr.bf16.mxu0 0
    %356 = vmatpush2.bf16.xpose.msra.mxu0 0
    %357 = vmatprep.mubr.bf16.mxu0 0
    %358 = vmatmul.mubr.bf16.gmra.mxu0 %v320
    %v359 = vpop.f32.mrf.mxu0
    %v360 = vadd.f32 0.0, %v359
    %v361 = vpop.f32.mrf.mxu0
    %v362 = vpop.f32.mrf.mxu0
    %v363 = vpop.f32.mrf.mxu0
    %364 = vdwg.mxu0
    %365 = vrot.lane.b32.xlu0 %v265, 120
    %v366 = vpop.permute.xlu0 %365
    %367 = vrot.lane.b32.xlu0 %v270, 120
    %v368 = vpop.permute.xlu0 %367
    %v370 = vsel %vm272, %v366, 0
    %v373 = vsel %vm272, %v368, 0
    %375 = vmatprep.subr.bf16.mxu0 0
    %376 = vmatpush1.bf16.xpose.msra.mxu0 0
    %377 = vmatprep.subr.bf16.mxu0 0
    %378 = vmatpush1.bf16.xpose.msra.mxu0 0
    %379 = vmatprep.subr.bf16.mxu0 0
    %380 = vmatpush1.bf16.xpose.msra.mxu0 0
    %381 = vmatprep.subr.bf16.mxu0 0
    %382 = vmatpush1.bf16.xpose.msra.mxu0 0
    %383 = vmatprep.subr.bf16.mxu0 0
    %384 = vmatpush1.bf16.xpose.msra.mxu0 0
    %385 = vmatprep.subr.bf16.mxu0 0
    %386 = vmatpush1.bf16.xpose.msra.mxu0 0
    %387 = vmatprep.subr.bf16.mxu0 0
    %388 = vmatpush1.bf16.xpose.msra.mxu0 0
    %389 = vmatprep.subr.bf16.mxu0 0
    %390 = vmatpush1.bf16.xpose.msra.mxu0 %v373
    %391 = vmatprep.subr.bf16.mxu0 0
    %392 = vmatpush2.bf16.xpose.msra.mxu0 0
    %393 = vmatprep.subr.bf16.mxu0 0
    %394 = vmatpush2.bf16.xpose.msra.mxu0 0
    %395 = vmatprep.subr.bf16.mxu0 0
    %396 = vmatpush2.bf16.xpose.msra.mxu0 0
    %397 = vmatprep.subr.bf16.mxu0 0
    %398 = vmatpush2.bf16.xpose.msra.mxu0 0
    %399 = vmatprep.subr.bf16.mxu0 0
    %400 = vmatpush2.bf16.xpose.msra.mxu0 0
    %401 = vmatprep.subr.bf16.mxu0 0
    %402 = vmatpush2.bf16.xpose.msra.mxu0 0
    %403 = vmatprep.subr.bf16.mxu0 0
    %404 = vmatpush2.bf16.xpose.msra.mxu0 0
    %405 = vmatprep.subr.bf16.mxu0 0
    %406 = vmatpush2.bf16.xpose.msra.mxu0 0
    %407 = vmatprep.mubr.bf16.mxu0 0
    %408 = vmatmul.mubr.bf16.gmra.mxu0 %v370
    %v409 = vpop.f32.mrf.mxu0
    %v410 = vadd.f32 0.0, %v409
    %v411 = vpop.f32.mrf.mxu0
    %v412 = vpop.f32.mrf.mxu0
    %v413 = vpop.f32.mrf.mxu0
    %414 = vdwg.mxu0
    %415 = vrot.lane.b32.xlu0 %v266, 120
    %v416 = vpop.permute.xlu0 %415
    %417 = vrot.lane.b32.xlu0 %v271, 120
    %v418 = vpop.permute.xlu0 %417
    %v420 = vsel %vm272, %v416, 0
    %v423 = vsel %vm272, %v418, 0
    %425 = vmatprep.subr.bf16.mxu0 0
    %426 = vmatpush1.bf16.xpose.msra.mxu0 0
    %427 = vmatprep.subr.bf16.mxu0 0
    %428 = vmatpush1.bf16.xpose.msra.mxu0 0
    %429 = vmatprep.subr.bf16.mxu0 0
    %430 = vmatpush1.bf16.xpose.msra.mxu0 0
    %431 = vmatprep.subr.bf16.mxu0 0
    %432 = vmatpush1.bf16.xpose.msra.mxu0 0
    %433 = vmatprep.subr.bf16.mxu0 0
    %434 = vmatpush1.bf16.xpose.msra.mxu0 0
    %435 = vmatprep.subr.bf16.mxu0 0
    %436 = vmatpush1.bf16.xpose.msra.mxu0 0
    %437 = vmatprep.subr.bf16.mxu0 0
    %438 = vmatpush1.bf16.xpose.msra.mxu0 0
    %439 = vmatprep.subr.bf16.mxu0 0
    %440 = vmatpush1.bf16.xpose.msra.mxu0 %v423
    %441 = vmatprep.subr.bf16.mxu0 0
    %442 = vmatpush2.bf16.xpose.msra.mxu0 0
    %443 = vmatprep.subr.bf16.mxu0 0
    %444 = vmatpush2.bf16.xpose.msra.mxu0 0
    %445 = vmatprep.subr.bf16.mxu0 0
    %446 = vmatpush2.bf16.xpose.msra.mxu0 0
    %447 = vmatprep.subr.bf16.mxu0 0
    %448 = vmatpush2.bf16.xpose.msra.mxu0 0
    %449 = vmatprep.subr.bf16.mxu0 0
    %450 = vmatpush2.bf16.xpose.msra.mxu0 0
    %451 = vmatprep.subr.bf16.mxu0 0
    %452 = vmatpush2.bf16.xpose.msra.mxu0 0
    %453 = vmatprep.subr.bf16.mxu0 0
    %454 = vmatpush2.bf16.xpose.msra.mxu0 0
    %455 = vmatprep.subr.bf16.mxu0 0
    %456 = vmatpush2.bf16.xpose.msra.mxu0 0
    %457 = vmatprep.mubr.bf16.mxu0 0
    %458 = vmatmul.mubr.bf16.gmra.mxu0 %v420
    %v459 = vpop.f32.mrf.mxu0
    %v460 = vadd.f32 0.0, %v459
    %v461 = vpop.f32.mrf.mxu0
    %v462 = vpop.f32.mrf.mxu0
    %v463 = vpop.f32.mrf.mxu0
    %464 = vdwg.mxu0
    %465 = vrot.lane.b32.xlu0 %v265, 112
    %v466 = vpop.permute.xlu0 %465
    %467 = vrot.lane.b32.xlu0 %v270, 112
    %v468 = vpop.permute.xlu0 %467
    %v470 = vsel %vm272, %v466, 0
    %v473 = vsel %vm272, %v468, 0
    %475 = vmatprep.subr.bf16.mxu0 0
    %476 = vmatpush1.bf16.xpose.msra.mxu0 0
    %477 = vmatprep.subr.bf16.mxu0 0
    %478 = vmatpush1.bf16.xpose.msra.mxu0 0
    %479 = vmatprep.subr.bf16.mxu0 0
    %480 = vmatpush1.bf16.xpose.msra.mxu0 0
    %481 = vmatprep.subr.bf16.mxu0 0
    %482 = vmatpush1.bf16.xpose.msra.mxu0 0
    %483 = vmatprep.subr.bf16.mxu0 0
    %484 = vmatpush1.bf16.xpose.msra.mxu0 0
    %485 = vmatprep.subr.bf16.mxu0 0
    %486 = vmatpush1.bf16.xpose.msra.mxu0 0
    %487 = vmatprep.subr.bf16.mxu0 0
    %488 = vmatpush1.bf16.xpose.msra.mxu0 0
    %489 = vmatprep.subr.bf16.mxu0 0
    %490 = vmatpush1.bf16.xpose.msra.mxu0 %v473
    %491 = vmatprep.subr.bf16.mxu0 0
    %492 = vmatpush2.bf16.xpose.msra.mxu0 0
    %493 = vmatprep.subr.bf16.mxu0 0
    %494 = vmatpush2.bf16.xpose.msra.mxu0 0
    %495 = vmatprep.subr.bf16.mxu0 0
    %496 = vmatpush2.bf16.xpose.msra.mxu0 0
    %497 = vmatprep.subr.bf16.mxu0 0
    %498 = vmatpush2.bf16.xpose.msra.mxu0 0
    %499 = vmatprep.subr.bf16.mxu0 0
    %500 = vmatpush2.bf16.xpose.msra.mxu0 0
    %501 = vmatprep.subr.bf16.mxu0 0
    %502 = vmatpush2.bf16.xpose.msra.mxu0 0
    %503 = vmatprep.subr.bf16.mxu0 0
    %504 = vmatpush2.bf16.xpose.msra.mxu0 0
    %505 = vmatprep.subr.bf16.mxu0 0
    %506 = vmatpush2.bf16.xpose.msra.mxu0 0
    %507 = vmatprep.mubr.bf16.mxu0 0
    %508 = vmatmul.mubr.bf16.gmra.mxu0 %v470
    %v509 = vpop.f32.mrf.mxu0
    %v510 = vadd.f32 0.0, %v509
    %v511 = vpop.f32.mrf.mxu0
    %v512 = vpop.f32.mrf.mxu0
    %v513 = vpop.f32.mrf.mxu0
    %514 = vdwg.mxu0
    %515 = vrot.lane.b32.xlu0 %v266, 112
    %v516 = vpop.permute.xlu0 %515
    %517 = vrot.lane.b32.xlu0 %v271, 112
    %v518 = vpop.permute.xlu0 %517
    %v520 = vsel %vm272, %v516, 0
    %v523 = vsel %vm272, %v518, 0
    %525 = vmatprep.subr.bf16.mxu0 0
    %526 = vmatpush1.bf16.xpose.msra.mxu0 0
    %527 = vmatprep.subr.bf16.mxu0 0
    %528 = vmatpush1.bf16.xpose.msra.mxu0 0
    %529 = vmatprep.subr.bf16.mxu0 0
    %530 = vmatpush1.bf16.xpose.msra.mxu0 0
    %531 = vmatprep.subr.bf16.mxu0 0
    %532 = vmatpush1.bf16.xpose.msra.mxu0 0
    %533 = vmatprep.subr.bf16.mxu0 0
    %534 = vmatpush1.bf16.xpose.msra.mxu0 0
    %535 = vmatprep.subr.bf16.mxu0 0
    %536 = vmatpush1.bf16.xpose.msra.mxu0 0
    %537 = vmatprep.subr.bf16.mxu0 0
    %538 = vmatpush1.bf16.xpose.msra.mxu0 0
    %539 = vmatprep.subr.bf16.mxu0 0
    %540 = vmatpush1.bf16.xpose.msra.mxu0 %v523
    %541 = vmatprep.subr.bf16.mxu0 0
    %542 = vmatpush2.bf16.xpose.msra.mxu0 0
    %543 = vmatprep.subr.bf16.mxu0 0
    %544 = vmatpush2.bf16.xpose.msra.mxu0 0
    %545 = vmatprep.subr.bf16.mxu0 0
    %546 = vmatpush2.bf16.xpose.msra.mxu0 0
    %547 = vmatprep.subr.bf16.mxu0 0
    %548 = vmatpush2.bf16.xpose.msra.mxu0 0
    %549 = vmatprep.subr.bf16.mxu0 0
    %550 = vmatpush2.bf16.xpose.msra.mxu0 0
    %551 = vmatprep.subr.bf16.mxu0 0
    %552 = vmatpush2.bf16.xpose.msra.mxu0 0
    %553 = vmatprep.subr.bf16.mxu0 0
    %554 = vmatpush2.bf16.xpose.msra.mxu0 0
    %555 = vmatprep.subr.bf16.mxu0 0
    %556 = vmatpush2.bf16.xpose.msra.mxu0 0
    %557 = vmatprep.mubr.bf16.mxu0 0
    %558 = vmatmul.mubr.bf16.gmra.mxu0 %v520
    %v559 = vpop.f32.mrf.mxu0
    %v560 = vadd.f32 0.0, %v559
    %v561 = vpop.f32.mrf.mxu0
    %v562 = vpop.f32.mrf.mxu0
    %v563 = vpop.f32.mrf.mxu0
    %564 = vdwg.mxu0
    %565 = vrot.lane.b32.xlu0 %v265, 104
    %v566 = vpop.permute.xlu0 %565
    %567 = vrot.lane.b32.xlu0 %v270, 104
    %v568 = vpop.permute.xlu0 %567
    %v570 = vsel %vm272, %v566, 0
    %v573 = vsel %vm272, %v568, 0
    %575 = vmatprep.subr.bf16.mxu0 0
    %576 = vmatpush1.bf16.xpose.msra.mxu0 0
    %577 = vmatprep.subr.bf16.mxu0 0
    %578 = vmatpush1.bf16.xpose.msra.mxu0 0
    %579 = vmatprep.subr.bf16.mxu0 0
    %580 = vmatpush1.bf16.xpose.msra.mxu0 0
    %581 = vmatprep.subr.bf16.mxu0 0
    %582 = vmatpush1.bf16.xpose.msra.mxu0 0
    %583 = vmatprep.subr.bf16.mxu0 0
    %584 = vmatpush1.bf16.xpose.msra.mxu0 0
    %585 = vmatprep.subr.bf16.mxu0 0
    %586 = vmatpush1.bf16.xpose.msra.mxu0 0
    %587 = vmatprep.subr.bf16.mxu0 0
    %588 = vmatpush1.bf16.xpose.msra.mxu0 0
    %589 = vmatprep.subr.bf16.mxu0 0
    %590 = vmatpush1.bf16.xpose.msra.mxu0 %v573
    %591 = vmatprep.subr.bf16.mxu0 0
    %592 = vmatpush2.bf16.xpose.msra.mxu0 0
    %593 = vmatprep.subr.bf16.mxu0 0
    %594 = vmatpush2.bf16.xpose.msra.mxu0 0
    %595 = vmatprep.subr.bf16.mxu0 0
    %596 = vmatpush2.bf16.xpose.msra.mxu0 0
    %597 = vmatprep.subr.bf16.mxu0 0
    %598 = vmatpush2.bf16.xpose.msra.mxu0 0
    %599 = vmatprep.subr.bf16.mxu0 0
    %600 = vmatpush2.bf16.xpose.msra.mxu0 0
    %601 = vmatprep.subr.bf16.mxu0 0
    %602 = vmatpush2.bf16.xpose.msra.mxu0 0
    %603 = vmatprep.subr.bf16.mxu0 0
    %604 = vmatpush2.bf16.xpose.msra.mxu0 0
    %605 = vmatprep.subr.bf16.mxu0 0
    %606 = vmatpush2.bf16.xpose.msra.mxu0 0
    %607 = vmatprep.mubr.bf16.mxu0 0
    %608 = vmatmul.mubr.bf16.gmra.mxu0 %v570
    %v609 = vpop.f32.mrf.mxu0
    %v610 = vadd.f32 0.0, %v609
    %v611 = vpop.f32.mrf.mxu0
    %v612 = vpop.f32.mrf.mxu0
    %v613 = vpop.f32.mrf.mxu0
    %614 = vdwg.mxu0
    %615 = vrot.lane.b32.xlu0 %v266, 104
    %v616 = vpop.permute.xlu0 %615
    %617 = vrot.lane.b32.xlu0 %v271, 104
    %v618 = vpop.permute.xlu0 %617
    %v620 = vsel %vm272, %v616, 0
    %v623 = vsel %vm272, %v618, 0
    %625 = vmatprep.subr.bf16.mxu0 0
    %626 = vmatpush1.bf16.xpose.msra.mxu0 0
    %627 = vmatprep.subr.bf16.mxu0 0
    %628 = vmatpush1.bf16.xpose.msra.mxu0 0
    %629 = vmatprep.subr.bf16.mxu0 0
    %630 = vmatpush1.bf16.xpose.msra.mxu0 0
    %631 = vmatprep.subr.bf16.mxu0 0
    %632 = vmatpush1.bf16.xpose.msra.mxu0 0
    %633 = vmatprep.subr.bf16.mxu0 0
    %634 = vmatpush1.bf16.xpose.msra.mxu0 0
    %635 = vmatprep.subr.bf16.mxu0 0
    %636 = vmatpush1.bf16.xpose.msra.mxu0 0
    %637 = vmatprep.subr.bf16.mxu0 0
    %638 = vmatpush1.bf16.xpose.msra.mxu0 0
    %639 = vmatprep.subr.bf16.mxu0 0
    %640 = vmatpush1.bf16.xpose.msra.mxu0 %v623
    %641 = vmatprep.subr.bf16.mxu0 0
    %642 = vmatpush2.bf16.xpose.msra.mxu0 0
    %643 = vmatprep.subr.bf16.mxu0 0
    %644 = vmatpush2.bf16.xpose.msra.mxu0 0
    %645 = vmatprep.subr.bf16.mxu0 0
    %646 = vmatpush2.bf16.xpose.msra.mxu0 0
    %647 = vmatprep.subr.bf16.mxu0 0
    %648 = vmatpush2.bf16.xpose.msra.mxu0 0
    %649 = vmatprep.subr.bf16.mxu0 0
    %650 = vmatpush2.bf16.xpose.msra.mxu0 0
    %651 = vmatprep.subr.bf16.mxu0 0
    %652 = vmatpush2.bf16.xpose.msra.mxu0 0
    %653 = vmatprep.subr.bf16.mxu0 0
    %654 = vmatpush2.bf16.xpose.msra.mxu0 0
    %655 = vmatprep.subr.bf16.mxu0 0
    %656 = vmatpush2.bf16.xpose.msra.mxu0 0
    %657 = vmatprep.mubr.bf16.mxu0 0
    %658 = vmatmul.mubr.bf16.gmra.mxu0 %v620
    %v659 = vpop.f32.mrf.mxu0
    %v660 = vadd.f32 0.0, %v659
    %v661 = vpop.f32.mrf.mxu0
    %v662 = vpop.f32.mrf.mxu0
    %v663 = vpop.f32.mrf.mxu0
    %664 = vdwg.mxu0
    %v665 = vadd.f32 %v314, %v260
    %v666 = vadd.f32 %v360, %v261
    %v667 = vadd.f32 %v410, %v260
    %v668 = vadd.f32 %v460, %v261
    %v669 = vadd.f32 %v510, %v260
    %v670 = vadd.f32 %v560, %v261
    %v671 = vadd.f32 %v610, %v260
    %v672 = vadd.f32 %v660, %v261
    %v673 = vsel %vm272, %v665, -inf
    %674 = vmax.xlane.f32.xlu0 %v673
    %v675 = vpop.xlane.xlu0 %674
    %v676 = vsel %vm272, %v666, -inf
    %677 = vmax.xlane.f32.xlu0 %v676
    %v678 = vpop.xlane.xlu0 %677
    %v679 = vsel %vm272, %v667, -inf
    %680 = vmax.xlane.f32.xlu0 %v679
    %v681 = vpop.xlane.xlu0 %680
    %v682 = vsel %vm272, %v668, -inf
    %683 = vmax.xlane.f32.xlu0 %v682
    %v684 = vpop.xlane.xlu0 %683
    %v685 = vsel %vm272, %v669, -inf
    %686 = vmax.xlane.f32.xlu0 %v685
    %v687 = vpop.xlane.xlu0 %686
    %v688 = vsel %vm272, %v670, -inf
    %689 = vmax.xlane.f32.xlu0 %v688
    %v690 = vpop.xlane.xlu0 %689
    %v691 = vsel %vm272, %v671, -inf
    %692 = vmax.xlane.f32.xlu0 %v691
    %v693 = vpop.xlane.xlu0 %692
    %v694 = vsel %vm272, %v672, -inf
    %695 = vmax.xlane.f32.xlu0 %v694
    %v696 = vpop.xlane.xlu0 %695
    %v697 = vsub.f32 %v665, %v675
    %v698 = vsub.f32 %v666, %v678
    %v699 = vsub.f32 %v667, %v681
    %v700 = vsub.f32 %v668, %v684
    %v701 = vsub.f32 %v669, %v687
    %v702 = vsub.f32 %v670, %v690
    %v703 = vsub.f32 %v671, %v693
    %v704 = vsub.f32 %v672, %v696
    %v705 = vmul.f32 %v697, 1.442695
    %v706 = vpow.pop %v705
    %v707 = vmul.f32 %v698, 1.442695
    %v708 = vpow.pop %v707
    %v709 = vmul.f32 %v699, 1.442695
    %v710 = vpow.pop %v709
    %v711 = vmul.f32 %v700, 1.442695
    %v712 = vpow.pop %v711
    %v713 = vmul.f32 %v701, 1.442695
    %v714 = vpow.pop %v713
    %v715 = vmul.f32 %v702, 1.442695
    %v716 = vpow.pop %v715
    %v717 = vmul.f32 %v703, 1.442695
    %v718 = vpow.pop %v717
    %v719 = vmul.f32 %v704, 1.442695
    %v720 = vpow.pop %v719
    %v721 = vsel %vm272, %v706, 0.0
    %722 = vadd.xlane.f32.xlu0 %v721
    %v723 = vpop.xlane.xlu0 %722
    %v724 = vsel %vm272, %v708, 0.0
    %725 = vadd.xlane.f32.xlu0 %v724
    %v726 = vpop.xlane.xlu0 %725
    %v727 = vsel %vm272, %v710, 0.0
    %728 = vadd.xlane.f32.xlu0 %v727
    %v729 = vpop.xlane.xlu0 %728
    %v730 = vsel %vm272, %v712, 0.0
    %731 = vadd.xlane.f32.xlu0 %v730
    %v732 = vpop.xlane.xlu0 %731
    %v733 = vsel %vm272, %v714, 0.0
    %734 = vadd.xlane.f32.xlu0 %v733
    %v735 = vpop.xlane.xlu0 %734
    %v736 = vsel %vm272, %v716, 0.0
    %737 = vadd.xlane.f32.xlu0 %v736
    %v738 = vpop.xlane.xlu0 %737
    %v739 = vsel %vm272, %v718, 0.0
    %740 = vadd.xlane.f32.xlu0 %v739
    %v741 = vpop.xlane.xlu0 %740
    %v742 = vsel %vm272, %v720, 0.0
    %743 = vadd.xlane.f32.xlu0 %v742
    %v744 = vpop.xlane.xlu0 %743
    %v745 = vrcp.pop %v723
    %v746 = vmul.f32 %v706, %v745
    %v747 = vrcp.pop %v726
    %v748 = vmul.f32 %v708, %v747
    %v749 = vrcp.pop %v729
    %v750 = vmul.f32 %v710, %v749
    %v751 = vrcp.pop %v732
    %v752 = vmul.f32 %v712, %v751
    %v753 = vrcp.pop %v735
    %v754 = vmul.f32 %v714, %v753
    %v755 = vrcp.pop %v738
    %v756 = vmul.f32 %v716, %v755
    %v757 = vrcp.pop %v741
    %v758 = vmul.f32 %v718, %v757
    %v759 = vrcp.pop %v744
    %v760 = vmul.f32 %v720, %v759
    %763 = vrot.lane.b32.xlu0 %v750, 8
    %v764 = vpop.permute.xlu0 %763
    %765 = vrot.lane.b32.xlu0 %v752, 8
    %v766 = vpop.permute.xlu0 %765
    %771 = vrot.lane.b32.xlu0 %v754, 16
    %v772 = vpop.permute.xlu0 %771
    %773 = vrot.lane.b32.xlu0 %v756, 16
    %v774 = vpop.permute.xlu0 %773
    %779 = vrot.lane.b32.xlu0 %v758, 24
    %v780 = vpop.permute.xlu0 %779
    %781 = vrot.lane.b32.xlu0 %v760, 24
    %v782 = vpop.permute.xlu0 %781
    %v785 = vsel %vm272, %v746, %v764
    %v786 = vsel %vm272, %v748, %v766
    %vm787 = vcmask 130048
    %v788 = vsel %vm787, %v785, %v772
    %v789 = vsel %vm787, %v786, %v774
    %vm790 = vcmask 195584
    %v791 = vsel %vm790, %v788, %v780
    %v792 = vsel %vm790, %v789, %v782
    %793 = vst.msk [vmem:[#allocation8] sm:$0xff] %vm80, %v791
    %794 = vst.msk [vmem:[#allocation8 + $0x8] sm:$0xff] %vm80, %v792
    %v795 = vpack.c.bf16 %v748, %v746
    %v796 = vpack.c.bf16 %v752, %v750
    %v797 = vpack.c.bf16 %v756, %v754
    %v798 = vpack.c.bf16 %v760, %v758
    %v800 = vunpack.c.l.b16 %v795
    %v801 = vunpack.c.h.b16 %v795
    %v802 = vpack.c.b16 %v800, %v800
    %v803 = vpack.c.b16 %v801, %v801
    %v805 = vunpack.c.l.b16 %v259
    %v806 = vunpack.c.h.b16 %v259
    %v807 = vpack.c.b16 %v805, %v805
    %v808 = vpack.c.b16 %v806, %v806
    %v810 = vsel %vm272, %v802, 0
    %vm812 = vcmask 1043456
    %v814 = vsel %vm812, %v807, 0
    %816 = vmatprep.subr.bf16.mxu0 0
    %817 = vmatpush1.bf16.msra.mxu0 0
    %818 = vmatprep.subr.bf16.mxu0 0
    %819 = vmatpush1.bf16.msra.mxu0 0
    %820 = vmatprep.subr.bf16.mxu0 0
    %821 = vmatpush1.bf16.msra.mxu0 0
    %822 = vmatprep.subr.bf16.mxu0 0
    %823 = vmatpush1.bf16.msra.mxu0 0
    %824 = vmatprep.subr.bf16.mxu0 0
    %825 = vmatpush1.bf16.msra.mxu0 0
    %826 = vmatprep.subr.bf16.mxu0 0
    %827 = vmatpush1.bf16.msra.mxu0 0
    %828 = vmatprep.subr.bf16.mxu0 0
    %829 = vmatpush1.bf16.msra.mxu0 0
    %830 = vmatprep.subr.bf16.mxu0 0
    %831 = vmatpush1.bf16.msra.mxu0 %v814
    %832 = vmatprep.subr.bf16.mxu0 0
    %833 = vmatpush2.bf16.msra.mxu0 0
    %834 = vmatprep.subr.bf16.mxu0 0
    %835 = vmatpush2.bf16.msra.mxu0 0
    %836 = vmatprep.subr.bf16.mxu0 0
    %837 = vmatpush2.bf16.msra.mxu0 0
    %838 = vmatprep.subr.bf16.mxu0 0
    %839 = vmatpush2.bf16.msra.mxu0 0
    %840 = vmatprep.subr.bf16.mxu0 0
    %841 = vmatpush2.bf16.msra.mxu0 0
    %842 = vmatprep.subr.bf16.mxu0 0
    %843 = vmatpush2.bf16.msra.mxu0 0
    %844 = vmatprep.subr.bf16.mxu0 0
    %845 = vmatpush2.bf16.msra.mxu0 0
    %846 = vmatprep.subr.bf16.mxu0 0
    %847 = vmatpush2.bf16.msra.mxu0 0
    %848 = vmatprep.mubr.bf16.mxu0 0
    %849 = vmatmul.mubr.bf16.gmra.mxu0 %v810
    %v850 = vpop.f32.mrf.mxu0
    %v851 = vadd.f32 0.0, %v850
    %v852 = vpop.f32.mrf.mxu0
    %v853 = vpop.f32.mrf.mxu0
    %v854 = vpop.f32.mrf.mxu0
    %855 = vdwg.mxu0
    %v857 = vsel %vm272, %v803, 0
    %v860 = vsel %vm812, %v808, 0
    %862 = vmatprep.subr.bf16.mxu0 0
    %863 = vmatpush1.bf16.msra.mxu0 0
    %864 = vmatprep.subr.bf16.mxu0 0
    %865 = vmatpush1.bf16.msra.mxu0 0
    %866 = vmatprep.subr.bf16.mxu0 0
    %867 = vmatpush1.bf16.msra.mxu0 0
    %868 = vmatprep.subr.bf16.mxu0 0
    %869 = vmatpush1.bf16.msra.mxu0 0
    %870 = vmatprep.subr.bf16.mxu0 0
    %871 = vmatpush1.bf16.msra.mxu0 0
    %872 = vmatprep.subr.bf16.mxu0 0
    %873 = vmatpush1.bf16.msra.mxu0 0
    %874 = vmatprep.subr.bf16.mxu0 0
    %875 = vmatpush1.bf16.msra.mxu0 0
    %876 = vmatprep.subr.bf16.mxu0 0
    %877 = vmatpush1.bf16.msra.mxu0 %v860
    %878 = vmatprep.subr.bf16.mxu0 0
    %879 = vmatpush2.bf16.msra.mxu0 0
    %880 = vmatprep.subr.bf16.mxu0 0
    %881 = vmatpush2.bf16.msra.mxu0 0
    %882 = vmatprep.subr.bf16.mxu0 0
    %883 = vmatpush2.bf16.msra.mxu0 0
    %884 = vmatprep.subr.bf16.mxu0 0
    %885 = vmatpush2.bf16.msra.mxu0 0
    %886 = vmatprep.subr.bf16.mxu0 0
    %887 = vmatpush2.bf16.msra.mxu0 0
    %888 = vmatprep.subr.bf16.mxu0 0
    %889 = vmatpush2.bf16.msra.mxu0 0
    %890 = vmatprep.subr.bf16.mxu0 0
    %891 = vmatpush2.bf16.msra.mxu0 0
    %892 = vmatprep.subr.bf16.mxu0 0
    %893 = vmatpush2.bf16.msra.mxu0 0
    %894 = vmatprep.mubr.bf16.mxu0 0
    %895 = vmatmul.mubr.bf16.gmra.mxu0 %v857
    %v896 = vpop.f32.mrf.mxu0
    %v897 = vadd.f32 0.0, %v896
    %v898 = vpop.f32.mrf.mxu0
    %v899 = vpop.f32.mrf.mxu0
    %v900 = vpop.f32.mrf.mxu0
    %901 = vdwg.mxu0
    %v903 = vunpack.c.l.b16 %v796
    %v904 = vunpack.c.h.b16 %v796
    %v905 = vpack.c.b16 %v903, %v903
    %v906 = vpack.c.b16 %v904, %v904
    %907 = vrot.lane.b32.xlu0 %v807, 120
    %v908 = vpop.permute.xlu0 %907
    %v910 = vsel %vm272, %v905, 0
    %v913 = vsel %vm812, %v908, 0
    %915 = vmatprep.subr.bf16.mxu0 0
    %916 = vmatpush1.bf16.msra.mxu0 0
    %917 = vmatprep.subr.bf16.mxu0 0
    %918 = vmatpush1.bf16.msra.mxu0 0
    %919 = vmatprep.subr.bf16.mxu0 0
    %920 = vmatpush1.bf16.msra.mxu0 0
    %921 = vmatprep.subr.bf16.mxu0 0
    %922 = vmatpush1.bf16.msra.mxu0 0
    %923 = vmatprep.subr.bf16.mxu0 0
    %924 = vmatpush1.bf16.msra.mxu0 0
    %925 = vmatprep.subr.bf16.mxu0 0
    %926 = vmatpush1.bf16.msra.mxu0 0
    %927 = vmatprep.subr.bf16.mxu0 0
    %928 = vmatpush1.bf16.msra.mxu0 0
    %929 = vmatprep.subr.bf16.mxu0 0
    %930 = vmatpush1.bf16.msra.mxu0 %v913
    %931 = vmatprep.subr.bf16.mxu0 0
    %932 = vmatpush2.bf16.msra.mxu0 0
    %933 = vmatprep.subr.bf16.mxu0 0
    %934 = vmatpush2.bf16.msra.mxu0 0
    %935 = vmatprep.subr.bf16.mxu0 0
    %936 = vmatpush2.bf16.msra.mxu0 0
    %937 = vmatprep.subr.bf16.mxu0 0
    %938 = vmatpush2.bf16.msra.mxu0 0
    %939 = vmatprep.subr.bf16.mxu0 0
    %940 = vmatpush2.bf16.msra.mxu0 0
    %941 = vmatprep.subr.bf16.mxu0 0
    %942 = vmatpush2.bf16.msra.mxu0 0
    %943 = vmatprep.subr.bf16.mxu0 0
    %944 = vmatpush2.bf16.msra.mxu0 0
    %945 = vmatprep.subr.bf16.mxu0 0
    %946 = vmatpush2.bf16.msra.mxu0 0
    %947 = vmatprep.mubr.bf16.mxu0 0
    %948 = vmatmul.mubr.bf16.gmra.mxu0 %v910
    %v949 = vpop.f32.mrf.mxu0
    %v950 = vadd.f32 0.0, %v949
    %v951 = vpop.f32.mrf.mxu0
    %v952 = vpop.f32.mrf.mxu0
    %v953 = vpop.f32.mrf.mxu0
    %954 = vdwg.mxu0
    %955 = vrot.lane.b32.xlu0 %v808, 120
    %v956 = vpop.permute.xlu0 %955
    %v958 = vsel %vm272, %v906, 0
    %v961 = vsel %vm812, %v956, 0
    %963 = vmatprep.subr.bf16.mxu0 0
    %964 = vmatpush1.bf16.msra.mxu0 0
    %965 = vmatprep.subr.bf16.mxu0 0
    %966 = vmatpush1.bf16.msra.mxu0 0
    %967 = vmatprep.subr.bf16.mxu0 0
    %968 = vmatpush1.bf16.msra.mxu0 0
    %969 = vmatprep.subr.bf16.mxu0 0
    %970 = vmatpush1.bf16.msra.mxu0 0
    %971 = vmatprep.subr.bf16.mxu0 0
    %972 = vmatpush1.bf16.msra.mxu0 0
    %973 = vmatprep.subr.bf16.mxu0 0
    %974 = vmatpush1.bf16.msra.mxu0 0
    %975 = vmatprep.subr.bf16.mxu0 0
    %976 = vmatpush1.bf16.msra.mxu0 0
    %977 = vmatprep.subr.bf16.mxu0 0
    %978 = vmatpush1.bf16.msra.mxu0 %v961
    %979 = vmatprep.subr.bf16.mxu0 0
    %980 = vmatpush2.bf16.msra.mxu0 0
    %981 = vmatprep.subr.bf16.mxu0 0
    %982 = vmatpush2.bf16.msra.mxu0 0
    %983 = vmatprep.subr.bf16.mxu0 0
    %984 = vmatpush2.bf16.msra.mxu0 0
    %985 = vmatprep.subr.bf16.mxu0 0
    %986 = vmatpush2.bf16.msra.mxu0 0
    %987 = vmatprep.subr.bf16.mxu0 0
    %988 = vmatpush2.bf16.msra.mxu0 0
    %989 = vmatprep.subr.bf16.mxu0 0
    %990 = vmatpush2.bf16.msra.mxu0 0
    %991 = vmatprep.subr.bf16.mxu0 0
    %992 = vmatpush2.bf16.msra.mxu0 0
    %993 = vmatprep.subr.bf16.mxu0 0
    %994 = vmatpush2.bf16.msra.mxu0 0
    %995 = vmatprep.mubr.bf16.mxu0 0
    %996 = vmatmul.mubr.bf16.gmra.mxu0 %v958
    %v997 = vpop.f32.mrf.mxu0
    %v998 = vadd.f32 0.0, %v997
    %v999 = vpop.f32.mrf.mxu0
    %v1000 = vpop.f32.mrf.mxu0
    %v1001 = vpop.f32.mrf.mxu0
    %1002 = vdwg.mxu0
    %v1004 = vunpack.c.l.b16 %v797
    %v1005 = vunpack.c.h.b16 %v797
    %v1006 = vpack.c.b16 %v1004, %v1004
    %v1007 = vpack.c.b16 %v1005, %v1005
    %1008 = vrot.lane.b32.xlu0 %v807, 112
    %v1009 = vpop.permute.xlu0 %1008
    %v1011 = vsel %vm272, %v1006, 0
    %v1014 = vsel %vm812, %v1009, 0
    %1016 = vmatprep.subr.bf16.mxu0 0
    %1017 = vmatpush1.bf16.msra.mxu0 0
    %1018 = vmatprep.subr.bf16.mxu0 0
    %1019 = vmatpush1.bf16.msra.mxu0 0
    %1020 = vmatprep.subr.bf16.mxu0 0
    %1021 = vmatpush1.bf16.msra.mxu0 0
    %1022 = vmatprep.subr.bf16.mxu0 0
    %1023 = vmatpush1.bf16.msra.mxu0 0
    %1024 = vmatprep.subr.bf16.mxu0 0
    %1025 = vmatpush1.bf16.msra.mxu0 0
    %1026 = vmatprep.subr.bf16.mxu0 0
    %1027 = vmatpush1.bf16.msra.mxu0 0
    %1028 = vmatprep.subr.bf16.mxu0 0
    %1029 = vmatpush1.bf16.msra.mxu0 0
    %1030 = vmatprep.subr.bf16.mxu0 0
    %1031 = vmatpush1.bf16.msra.mxu0 %v1014
    %1032 = vmatprep.subr.bf16.mxu0 0
    %1033 = vmatpush2.bf16.msra.mxu0 0
    %1034 = vmatprep.subr.bf16.mxu0 0
    %1035 = vmatpush2.bf16.msra.mxu0 0
    %1036 = vmatprep.subr.bf16.mxu0 0
    %1037 = vmatpush2.bf16.msra.mxu0 0
    %1038 = vmatprep.subr.bf16.mxu0 0
    %1039 = vmatpush2.bf16.msra.mxu0 0
    %1040 = vmatprep.subr.bf16.mxu0 0
    %1041 = vmatpush2.bf16.msra.mxu0 0
    %1042 = vmatprep.subr.bf16.mxu0 0
    %1043 = vmatpush2.bf16.msra.mxu0 0
    %1044 = vmatprep.subr.bf16.mxu0 0
    %1045 = vmatpush2.bf16.msra.mxu0 0
    %1046 = vmatprep.subr.bf16.mxu0 0
    %1047 = vmatpush2.bf16.msra.mxu0 0
    %1048 = vmatprep.mubr.bf16.mxu0 0
    %1049 = vmatmul.mubr.bf16.gmra.mxu0 %v1011
    %v1050 = vpop.f32.mrf.mxu0
    %v1051 = vadd.f32 0.0, %v1050
    %v1052 = vpop.f32.mrf.mxu0
    %v1053 = vpop.f32.mrf.mxu0
    %v1054 = vpop.f32.mrf.mxu0
    %1055 = vdwg.mxu0
    %1056 = vrot.lane.b32.xlu0 %v808, 112
    %v1057 = vpop.permute.xlu0 %1056
    %v1059 = vsel %vm272, %v1007, 0
    %v1062 = vsel %vm812, %v1057, 0
    %1064 = vmatprep.subr.bf16.mxu0 0
    %1065 = vmatpush1.bf16.msra.mxu0 0
    %1066 = vmatprep.subr.bf16.mxu0 0
    %1067 = vmatpush1.bf16.msra.mxu0 0
    %1068 = vmatprep.subr.bf16.mxu0 0
    %1069 = vmatpush1.bf16.msra.mxu0 0
    %1070 = vmatprep.subr.bf16.mxu0 0
    %1071 = vmatpush1.bf16.msra.mxu0 0
    %1072 = vmatprep.subr.bf16.mxu0 0
    %1073 = vmatpush1.bf16.msra.mxu0 0
    %1074 = vmatprep.subr.bf16.mxu0 0
    %1075 = vmatpush1.bf16.msra.mxu0 0
    %1076 = vmatprep.subr.bf16.mxu0 0
    %1077 = vmatpush1.bf16.msra.mxu0 0
    %1078 = vmatprep.subr.bf16.mxu0 0
    %1079 = vmatpush1.bf16.msra.mxu0 %v1062
    %1080 = vmatprep.subr.bf16.mxu0 0
    %1081 = vmatpush2.bf16.msra.mxu0 0
    %1082 = vmatprep.subr.bf16.mxu0 0
    %1083 = vmatpush2.bf16.msra.mxu0 0
    %1084 = vmatprep.subr.bf16.mxu0 0
    %1085 = vmatpush2.bf16.msra.mxu0 0
    %1086 = vmatprep.subr.bf16.mxu0 0
    %1087 = vmatpush2.bf16.msra.mxu0 0
    %1088 = vmatprep.subr.bf16.mxu0 0
    %1089 = vmatpush2.bf16.msra.mxu0 0
    %1090 = vmatprep.subr.bf16.mxu0 0
    %1091 = vmatpush2.bf16.msra.mxu0 0
    %1092 = vmatprep.subr.bf16.mxu0 0
    %1093 = vmatpush2.bf16.msra.mxu0 0
    %1094 = vmatprep.subr.bf16.mxu0 0
    %1095 = vmatpush2.bf16.msra.mxu0 0
    %1096 = vmatprep.mubr.bf16.mxu0 0
    %1097 = vmatmul.mubr.bf16.gmra.mxu0 %v1059
    %v1098 = vpop.f32.mrf.mxu0
    %v1099 = vadd.f32 0.0, %v1098
    %v1100 = vpop.f32.mrf.mxu0
    %v1101 = vpop.f32.mrf.mxu0
    %v1102 = vpop.f32.mrf.mxu0
    %1103 = vdwg.mxu0
    %v1105 = vunpack.c.l.b16 %v798
    %v1106 = vunpack.c.h.b16 %v798
    %v1107 = vpack.c.b16 %v1105, %v1105
    %v1108 = vpack.c.b16 %v1106, %v1106
    %1109 = vrot.lane.b32.xlu0 %v807, 104
    %v1110 = vpop.permute.xlu0 %1109
    %v1112 = vsel %vm272, %v1107, 0
    %v1115 = vsel %vm812, %v1110, 0
    %1117 = vmatprep.subr.bf16.mxu0 0
    %1118 = vmatpush1.bf16.msra.mxu0 0
    %1119 = vmatprep.subr.bf16.mxu0 0
    %1120 = vmatpush1.bf16.msra.mxu0 0
    %1121 = vmatprep.subr.bf16.mxu0 0
    %1122 = vmatpush1.bf16.msra.mxu0 0
    %1123 = vmatprep.subr.bf16.mxu0 0
    %1124 = vmatpush1.bf16.msra.mxu0 0
    %1125 = vmatprep.subr.bf16.mxu0 0
    %1126 = vmatpush1.bf16.msra.mxu0 0
    %1127 = vmatprep.subr.bf16.mxu0 0
    %1128 = vmatpush1.bf16.msra.mxu0 0
    %1129 = vmatprep.subr.bf16.mxu0 0
    %1130 = vmatpush1.bf16.msra.mxu0 0
    %1131 = vmatprep.subr.bf16.mxu0 0
    %1132 = vmatpush1.bf16.msra.mxu0 %v1115
    %1133 = vmatprep.subr.bf16.mxu0 0
    %1134 = vmatpush2.bf16.msra.mxu0 0
    %1135 = vmatprep.subr.bf16.mxu0 0
    %1136 = vmatpush2.bf16.msra.mxu0 0
    %1137 = vmatprep.subr.bf16.mxu0 0
    %1138 = vmatpush2.bf16.msra.mxu0 0
    %1139 = vmatprep.subr.bf16.mxu0 0
    %1140 = vmatpush2.bf16.msra.mxu0 0
    %1141 = vmatprep.subr.bf16.mxu0 0
    %1142 = vmatpush2.bf16.msra.mxu0 0
    %1143 = vmatprep.subr.bf16.mxu0 0
    %1144 = vmatpush2.bf16.msra.mxu0 0
    %1145 = vmatprep.subr.bf16.mxu0 0
    %1146 = vmatpush2.bf16.msra.mxu0 0
    %1147 = vmatprep.subr.bf16.mxu0 0
    %1148 = vmatpush2.bf16.msra.mxu0 0
    %1149 = vmatprep.mubr.bf16.mxu0 0
    %1150 = vmatmul.mubr.bf16.gmra.mxu0 %v1112
    %v1151 = vpop.f32.mrf.mxu0
    %v1152 = vadd.f32 0.0, %v1151
    %v1153 = vpop.f32.mrf.mxu0
    %v1154 = vpop.f32.mrf.mxu0
    %v1155 = vpop.f32.mrf.mxu0
    %1156 = vdwg.mxu0
    %1157 = vrot.lane.b32.xlu0 %v808, 104
    %v1158 = vpop.permute.xlu0 %1157
    %v1160 = vsel %vm272, %v1108, 0
    %v1163 = vsel %vm812, %v1158, 0
    %1165 = vmatprep.subr.bf16.mxu0 0
    %1166 = vmatpush1.bf16.msra.mxu0 0
    %1167 = vmatprep.subr.bf16.mxu0 0
    %1168 = vmatpush1.bf16.msra.mxu0 0
    %1169 = vmatprep.subr.bf16.mxu0 0
    %1170 = vmatpush1.bf16.msra.mxu0 0
    %1171 = vmatprep.subr.bf16.mxu0 0
    %1172 = vmatpush1.bf16.msra.mxu0 0
    %1173 = vmatprep.subr.bf16.mxu0 0
    %1174 = vmatpush1.bf16.msra.mxu0 0
    %1175 = vmatprep.subr.bf16.mxu0 0
    %1176 = vmatpush1.bf16.msra.mxu0 0
    %1177 = vmatprep.subr.bf16.mxu0 0
    %1178 = vmatpush1.bf16.msra.mxu0 0
    %1179 = vmatprep.subr.bf16.mxu0 0
    %1180 = vmatpush1.bf16.msra.mxu0 %v1163
    %1181 = vmatprep.subr.bf16.mxu0 0
    %1182 = vmatpush2.bf16.msra.mxu0 0
    %1183 = vmatprep.subr.bf16.mxu0 0
    %1184 = vmatpush2.bf16.msra.mxu0 0
    %1185 = vmatprep.subr.bf16.mxu0 0
    %1186 = vmatpush2.bf16.msra.mxu0 0
    %1187 = vmatprep.subr.bf16.mxu0 0
    %1188 = vmatpush2.bf16.msra.mxu0 0
    %1189 = vmatprep.subr.bf16.mxu0 0
    %1190 = vmatpush2.bf16.msra.mxu0 0
    %1191 = vmatprep.subr.bf16.mxu0 0
    %1192 = vmatpush2.bf16.msra.mxu0 0
    %1193 = vmatprep.subr.bf16.mxu0 0
    %1194 = vmatpush2.bf16.msra.mxu0 0
    %1195 = vmatprep.subr.bf16.mxu0 0
    %1196 = vmatpush2.bf16.msra.mxu0 0
    %1197 = vmatprep.mubr.bf16.mxu0 0
    %1198 = vmatmul.mubr.bf16.gmra.mxu0 %v1160
    %v1199 = vpop.f32.mrf.mxu0
    %v1200 = vadd.f32 0.0, %v1199
    %v1201 = vpop.f32.mrf.mxu0
    %v1202 = vpop.f32.mrf.mxu0
    %v1203 = vpop.f32.mrf.mxu0
    %1204 = vdwg.mxu0
    %1207 = vrot.lane.b32.xlu0 %v950, 8
    %v1208 = vpop.permute.xlu0 %1207
    %1209 = vrot.lane.b32.xlu0 %v998, 8
    %v1210 = vpop.permute.xlu0 %1209
    %1215 = vrot.lane.b32.xlu0 %v1051, 16
    %v1216 = vpop.permute.xlu0 %1215
    %1217 = vrot.lane.b32.xlu0 %v1099, 16
    %v1218 = vpop.permute.xlu0 %1217
    %1223 = vrot.lane.b32.xlu0 %v1152, 24
    %v1224 = vpop.permute.xlu0 %1223
    %1225 = vrot.lane.b32.xlu0 %v1200, 24
    %v1226 = vpop.permute.xlu0 %1225
    %v1229 = vsel %vm272, %v851, %v1208
    %v1230 = vsel %vm272, %v897, %v1210
    %v1231 = vsel %vm787, %v1229, %v1216
    %v1232 = vsel %vm787, %v1230, %v1218
    %v1233 = vsel %vm790, %v1231, %v1224
    %v1234 = vsel %vm790, %v1232, %v1226
    %v1235 = vpack.c.bf16 %v1234, %v1233
    %s1236 = scalar_lea.vmem [#allocation5], 48
    %v1237 = vld [vmem:[%s1236] sm:$0xf]
    %v1238 = vld [vmem:[%s1236 + $0x4] sm:$0xf]
    %v1239 = vld [vmem:[%s1236 + $0x8] sm:$0xf]
    %v1240 = vld [vmem:[%s1236 + $0xc] sm:$0xf]
    %v1241 = vlaneseq
    %v1242 = vshrl.u32 %v1241, 7
    %v1243 = vsub.s32 3, %v1242
    %v1244 = vrot.slane %v50, %v1243
    %v1249 = vunpack.c.l.b16 %v1237
    %v1250 = vunpack.c.l.b16 %v1238
    %v1251 = vunpack.c.l.b16 %v1239
    %v1252 = vunpack.c.l.b16 %v1240
    %v1253 = vpack.c.b16 %v1250, %v1249
    %v1254 = vpack.c.b16 %v1252, %v1251
    %v1258 = vsel %vm80, %v1235, 0
    %1260 = vmatprep.subr.bf16.mxu0 0
    %1261 = vmatpush1.bf16.msra.mxu0 0
    %1262 = vmatprep.subr.bf16.mxu0 0
    %1263 = vmatpush1.bf16.msra.mxu0 0
    %1264 = vmatprep.subr.bf16.mxu0 0
    %1265 = vmatpush1.bf16.msra.mxu0 0
    %1266 = vmatprep.subr.bf16.mxu0 0
    %1267 = vmatpush1.bf16.msra.mxu0 0
    %1268 = vmatprep.subr.bf16.mxu0 0
    %1269 = vmatpush1.bf16.msra.mxu0 0
    %1270 = vmatprep.subr.bf16.mxu0 0
    %1271 = vmatpush1.bf16.msra.mxu0 0
    %1272 = vmatprep.subr.bf16.mxu0 0
    %1273 = vmatpush1.bf16.msra.mxu0 %v1254
    %1274 = vmatprep.subr.bf16.mxu0 0
    %1275 = vmatpush1.bf16.msra.mxu0 %v1253
    %1276 = vmatprep.subr.bf16.mxu0 0
    %1277 = vmatpush2.bf16.msra.mxu0 0
    %1278 = vmatprep.subr.bf16.mxu0 0
    %1279 = vmatpush2.bf16.msra.mxu0 0
    %1280 = vmatprep.subr.bf16.mxu0 0
    %1281 = vmatpush2.bf16.msra.mxu0 0
    %1282 = vmatprep.subr.bf16.mxu0 0
    %1283 = vmatpush2.bf16.msra.mxu0 0
    %1284 = vmatprep.subr.bf16.mxu0 0
    %1285 = vmatpush2.bf16.msra.mxu0 0
    %1286 = vmatprep.subr.bf16.mxu0 0
    %1287 = vmatpush2.bf16.msra.mxu0 0
    %1288 = vmatprep.subr.bf16.mxu0 0
    %1289 = vmatpush2.bf16.msra.mxu0 0
    %1290 = vmatprep.subr.bf16.mxu0 0
    %1291 = vmatpush2.bf16.msra.mxu0 0
    %1292 = vmatprep.mubr.bf16.mxu0 0
    %1293 = vmatmul.mubr.bf16.gmra.mxu0 %v1258
    %v1294 = vpop.f32.mrf.mxu0
    %v1295 = vadd.f32 %v1244, %v1294
    %v1296 = vpop.f32.mrf.mxu0
    %v1297 = vpop.f32.mrf.mxu0
    %v1298 = vadd.f32 %v1244, %v1297
    %v1299 = vpop.f32.mrf.mxu0
    %1300 = vdwg.mxu0
    %v1301 = vadd.f32 %v1295, %v51
    %v1302 = vadd.f32 %v1298, %v52
    %v1303 = vsel %vm80, %v1301, 0.0
    %1304 = vadd.xlane.f32.xlu0 %v1303
    %v1305 = vpop.xlane.xlu0 %1304
    %v1306 = vsel %vm80, %v1302, 0.0
    %1307 = vadd.xlane.f32.xlu0 %v1306
    %v1308 = vpop.xlane.xlu0 %1307
    %v1309 = vrcp.pop 32.0
    %v1310 = vmul.f32 %v1305, %v1309
    %v1311 = vmul.f32 %v1308, %v1309
    %v1312 = vsub.f32 %v1301, %v1310
    %v1313 = vsub.f32 %v1302, %v1311
    %v1314 = vmul.f32 %v1312, %v1312
    %v1315 = vmul.f32 %v1313, %v1313
    %v1316 = vsel %vm80, %v1314, 0.0
    %1317 = vadd.xlane.f32.xlu0 %v1316
    %v1318 = vpop.xlane.xlu0 %1317
    %v1319 = vsel %vm80, %v1315, 0.0
    %1320 = vadd.xlane.f32.xlu0 %v1319
    %v1321 = vpop.xlane.xlu0 %1320
    %v1322 = vmul.f32 %v1318, %v1309
    %v1323 = vmul.f32 %v1321, %v1309
    %v1324 = vadd.f32 %v1322, 1e-05
    %v1325 = vadd.f32 %v1323, 1e-05
    %v1326 = vrsqrt.pop %v1324
    %v1327 = vrsqrt.pop %v1325
    %v1328 = vmul.f32 %v1312, %v1326
    %v1329 = vmul.f32 %v1313, %v1327
    %v1330 = vlaneseq
    %v1331 = vshrl.u32 %v1330, 7
    %v1332 = vsub.s32 4, %v1331
    %v1333 = vrot.slane %v50, %v1332
    %v1334 = vmul.f32 %v1328, %v1333
    %v1335 = vmul.f32 %v1329, %v1333
    %v1336 = vlaneseq
    %v1337 = vshrl.u32 %v1336, 7
    %v1338 = vsub.s32 5, %v1337
    %v1339 = vrot.slane %v50, %v1338
    %v1340 = vadd.f32 %v1334, %v1339
    %v1341 = vadd.f32 %v1335, %v1339
    %1342 = vst.msk [vmem:[#allocation7] sm:$0xff] %vm80, %v1340
    %1343 = vst.msk [vmem:[#allocation7 + $0x8] sm:$0xff] %vm80, %v1341
    // Predicated region
    $region26: #{tpu_custom_call.1} parent=1 // pred_check
      _
    $region27: #{tpu_custom_call.1} parent=1 // pred_check_branch
      %1345 = sbr.rel (0) target = $region29
    $region28: #{tpu_custom_call.1} parent=1 // pred_region
      %s1347 = ssub.s32 256, 256
      %1348 = vsyncadd [#allocation4], %s1347
      %s1349 = sshll.u32 [#allocation7], 4
      %s1350 = int_to_ptr.vmem [resolvable:$true] %s1349
      %1355 = dma.vmem_to_hbm [thread:$0]  %s1350, 256, %s4, [#allocation4], 128, 128, 8
    $region29: #{tpu_custom_call.1} parent=1 // pred_fallthru
      _
    // Predicated region
    $region30: #{tpu_custom_call.1} parent=1 // pred_check
      _
    $region31: #{tpu_custom_call.1} parent=1 // pred_check_branch
      %1357 = sbr.rel (0) target = $region33
    $region32: #{tpu_custom_call.1} parent=1 // pred_region
      %s1359 = ssub.s32 256, 256
      %1360 = vsyncadd [#allocation9], %s1359
      %s1361 = sshll.u32 [#allocation8], 4
      %s1362 = int_to_ptr.vmem [resolvable:$true] %s1361
      %1367 = dma.vmem_to_hbm [thread:$0]  %s1362, 256, %s5, [#allocation9], 128, 128, 8
    $region33: #{tpu_custom_call.1} parent=1 // pred_fallthru
      _
    // Predicated region
    $region34: #{tpu_custom_call.1} parent=1 // pred_check
      _
    $region35: #{tpu_custom_call.1} parent=1 // pred_check_branch
      %1369 = sbr.rel (0) target = $region37
    $region36: #{tpu_custom_call.1} parent=1 // pred_region
      %1370 = dma.done [#allocation4], 256
    $region37: #{tpu_custom_call.1} parent=1 // pred_fallthru
      _
    // Predicated region
    $region38: #{tpu_custom_call.1} parent=1 // pred_check
      _
    $region39: #{tpu_custom_call.1} parent=1 // pred_check_branch
      %1372 = sbr.rel (0) target = $region41
    $region40: #{tpu_custom_call.1} parent=1 // pred_region
      %1373 = dma.done [#allocation9], 256
    $region41: #{tpu_custom_call.1} parent=1 // pred_fallthru
      _
    %1374 = vsyncpa [#allocation3], 1
    %1375 = vsyncpa [#allocation6], 1
    %1376 = vsyncpa [#allocation4], 1
    %1377 = vsyncpa [#allocation9], 1

</llo_original>
